<compile_context>
chip_gen: v6e
topology: v6e:2x2x1
jax: 0.10.0
libtpu: 0.0.40
codegen_flags: <defaults>
</compile_context>

<pallas_src>
import functools

import jax
import jax.numpy as jnp
from jax.experimental import pallas as pl
from jax.experimental.pallas import tpu as pltpu


COMPUTE_DTYPE = jnp.bfloat16          # MXU input dtype (f32 accumulation)

_TM_CANDIDATES = (512, 256, 128)      # rows  (M = N*Ho*Wo)
_TK_CANDIDATES = (256, 128)           # reduction (K = KH*KW*Cin)
_TN_CANDIDATES = (256, 128)           # lanes (Cout)


def _round_up(x, m):
    return ((x + m - 1) // m) * m


def _pick_tile(padded_dim, candidates):
    for c in candidates:
        if padded_dim % c == 0:
            return c
    return candidates[-1]


# ----------------------------------------------------------------------------
# Pallas kernel: tiled  acc += P @ W ;  epilogue: +bias (+residual) (+ReLU)
# ----------------------------------------------------------------------------
def _fused_matmul_bias_kernel(p_ref, w_ref, bias_ref, *rest,
                              apply_relu, has_residual):
    if has_residual:
        res_ref, o_ref, acc_ref = rest
    else:
        o_ref, acc_ref = rest

    @pl.when(pl.program_id(2) == 0)
    def _():
        acc_ref[...] = jnp.zeros_like(acc_ref)

    acc_ref[...] += jnp.dot(p_ref[...], w_ref[...],
                            preferred_element_type=jnp.float32)

    @pl.when(pl.program_id(2) == pl.num_programs(2) - 1)
    def _():
        y = acc_ref[...] + bias_ref[...]          # BN bias (scale is in W)
        if has_residual:
            y = y + res_ref[...]
        if apply_relu:
            y = jnp.maximum(y, 0.0)
        o_ref[...] = y.astype(o_ref.dtype)


def fused_conv_bn(patches, w_mat, scale, bias, residual=None, relu=True,
                  compute_dtype=COMPUTE_DTYPE):
    """(patches @ (w*scale)) + bias (+residual) (+relu), tiled on the MXU.

    patches: (M, K) f32, w_mat: (K, N) f32, scale/bias: (N,) f32,
    residual: optional (M, N) f32.  Returns (M, N) f32.
    """
    M, K = patches.shape
    K2, N = w_mat.shape
    assert K == K2

    # Fold BN scale into the weights (removes a VPU multiply per element).
    w_scaled = w_mat * scale[None, :]

    # Lane-dense, 128-aligned padded shapes.
    Mp = _round_up(M, 128)
    Kp = _round_up(K, 128)
    Np = _round_up(N, 128)
    tm = _pick_tile(Mp, _TM_CANDIDATES)
    tk = _pick_tile(Kp, _TK_CANDIDATES)
    tn = _pick_tile(Np, _TN_CANDIDATES)

    p_pad = jnp.pad(patches.astype(compute_dtype), ((0, Mp - M), (0, Kp - K)))
    w_pad = jnp.pad(w_scaled.astype(compute_dtype), ((0, Kp - K), (0, Np - N)))
    b_pad = jnp.pad(bias.astype(jnp.float32)[None, :], ((0, 0), (0, Np - N)))

    inputs = [p_pad, w_pad, b_pad]
    in_specs = [
        pl.BlockSpec((tm, tk), lambda i, j, k: (i, k)),
        pl.BlockSpec((tk, tn), lambda i, j, k: (k, j)),
        pl.BlockSpec((1, tn), lambda i, j, k: (0, j)),
    ]
    io_aliases = {}
    if residual is not None:
        r_pad = jnp.pad(residual.astype(jnp.float32),
                        ((0, Mp - M), (0, Np - N)))
        inputs.append(r_pad)
        in_specs.append(pl.BlockSpec((tm, tn), lambda i, j, k: (i, j)))
        io_aliases = {3: 0}   # reuse the residual HBM buffer for the output

    grid = (Mp // tm, Np // tn, Kp // tk)

    itemsize = jnp.dtype(compute_dtype).itemsize
    bytes_accessed = (Mp * Kp * itemsize + Kp * Np * itemsize + Np * 4
                      + Mp * Np * 4 * (2 if residual is not None else 1))
    cost = pl.CostEstimate(flops=2 * Mp * Kp * Np, transcendentals=0,
                           bytes_accessed=int(bytes_accessed))

    # Double-buffered input tiles + resident output tile + f32 accumulator.
    res_tiles = 2 * tm * tn * 4 if residual is not None else 0
    vmem_need = (2 * (tm * tk + tk * tn) * itemsize + 2 * tn * 4
                 + res_tiles + 2 * tm * tn * 4 + tm * tn * 4)
    vmem_limit = int(max(2 * vmem_need, 16 * 1024 * 1024))

    kernel = functools.partial(_fused_matmul_bias_kernel,
                               apply_relu=relu,
                               has_residual=residual is not None)

    out = pl.pallas_call(
        kernel,
        out_shape=jax.ShapeDtypeStruct((Mp, Np), jnp.float32),
        grid_spec=pltpu.PrefetchScalarGridSpec(
            num_scalar_prefetch=0,
            grid=grid,
            in_specs=in_specs,
            out_specs=pl.BlockSpec((tm, tn), lambda i, j, k: (i, j)),
            scratch_shapes=[pltpu.VMEM((tm, tn), jnp.float32)]),
        input_output_aliases=io_aliases,
        cost_estimate=cost,
        compiler_params=pltpu.CompilerParams(
            dimension_semantics=("parallel", "parallel", "arbitrary"),
            vmem_limit_bytes=vmem_limit),
    )(*inputs)
    return out[:M, :N]


# ----------------------------------------------------------------------------
# Glue: im2col, weight reshape, BN folding
# ----------------------------------------------------------------------------
def _im2col(x_nhwc, ksize, stride, padding):
    n, h, w, c = x_nhwc.shape
    if padding > 0:
        x_nhwc = jnp.pad(x_nhwc, ((0, 0), (padding, padding),
                                  (padding, padding), (0, 0)))
    ho = (h + 2 * padding - ksize) // stride + 1
    wo = (w + 2 * padding - ksize) // stride + 1
    cols = []
    for kh in range(ksize):
        for kw in range(ksize):
            cols.append(x_nhwc[:, kh:kh + ho * stride:stride,
                               kw:kw + wo * stride:stride, :])
    patches = jnp.concatenate(cols, axis=-1)          # (N, Ho, Wo, K*K*C)
    return patches.reshape(n * ho * wo, ksize * ksize * c), (n, ho, wo)


def _weight_to_mat(w_oihw):
    # (Cout, Cin, KH, KW) -> (KH*KW*Cin, Cout), matching im2col (kh, kw, c).
    cout, cin, kh, kw = w_oihw.shape
    return jnp.transpose(w_oihw, (2, 3, 1, 0)).reshape(kh * kw * cin, cout)


def _fold_bn(gamma, beta, mean, var, eps=1e-5):
    scale = gamma / jnp.sqrt(var + eps)
    bias = beta - mean * scale
    return scale, bias


# ----------------------------------------------------------------------------
# BasicBlock forward (NCHW in / NCHW out, matching PyTorch)
# ----------------------------------------------------------------------------
@functools.partial(jax.jit, static_argnames=("stride",))
def basic_block_forward(x_nchw, params, stride):
    planes = params["conv1_w"].shape[0]
    has_proj = "conv_s_w" in params

    x = jnp.transpose(x_nchw, (0, 2, 3, 1)).astype(jnp.float32)   # NHWC

    # conv1 (3x3, stride) + bn1 + relu
    p1, (n, ho, wo) = _im2col(x, 3, stride, 1)
    s1, b1 = _fold_bn(*params["bn1"])
    out1 = fused_conv_bn(p1, _weight_to_mat(params["conv1_w"]), s1, b1,
                         relu=True)
    out1_nhwc = out1.reshape(n, ho, wo, planes)

    # shortcut (same row ordering / lane-dense layout as the conv2 output)
    if has_proj:
        ps, _ = _im2col(x, 1, stride, 0)
        ss, bs = _fold_bn(*params["bn_s"])
        sc = fused_conv_bn(ps, _weight_to_mat(params["conv_s_w"]), ss, bs,
                           relu=False)
    else:
        sc = x.reshape(n * ho * wo, planes)

    # conv2 (3x3, stride 1) + bn2 + residual add + relu (fully fused)
    p2, _ = _im2col(out1_nhwc, 3, 1, 1)
    s2, b2 = _fold_bn(*params["bn2"])
    out2 = fused_conv_bn(p2, _weight_to_mat(params["conv2_w"]), s2, b2,
                         residual=sc, relu=True)

    out_nhwc = out2.reshape(n, ho, wo, planes)
    return jnp.transpose(out_nhwc, (0, 3, 1, 2))                  # NCHW


# ----------------------------------------------------------------------------
# Pure-JAX reference (lax conv, same bf16 operand rounding) for correctness
# ----------------------------------------------------------------------------
def basic_block_reference(x_nchw, params, stride, compute_dtype=COMPUTE_DTYPE):
    has_proj = "conv_s_w" in params
    x = jnp.transpose(x_nchw, (0, 2, 3, 1)).astype(jnp.float32)

    def conv_bn(inp, w_oihw, bn, st, pad):
        scale, bias = _fold_bn(*bn)
        w_hwio = jnp.transpose(w_oihw, (2, 3, 1, 0)) * scale      # fold scale
        y = jax.lax.conv_general_dilated(
            inp.astype(compute_dtype), w_hwio.astype(compute_dtype),
            window_strides=(st, st),
            padding=[(pad, pad), (pad, pad)],
            dimension_numbers=("NHWC", "HWIO", "NHWC"),
            preferred_element_type=jnp.float32)
        return y + bias

    out = jnp.maximum(conv_bn(x, params["conv1_w"], params["bn1"], stride, 1), 0.0)
    out = conv_bn(out, params["conv2_w"], params["bn2"], 1, 1)
    if has_proj:
        sc = conv_bn(x, params["conv_s_w"], params["bn_s"], stride, 0)
    else:
        sc = x
    out = jnp.maximum(out + sc, 0.0)
    return jnp.transpose(out, (0, 3, 1, 2))


# ----------------------------------------------------------------------------
# Deterministic parameter construction (shapes from BasicBlock.__init__)
# ----------------------------------------------------------------------------
def make_params(key, inplanes, planes, stride):
    keys = jax.random.split(key, 6)

    def bn_params(k, c):
        k1, k2, k3, k4 = jax.random.split(k, 4)
        gamma = 0.5 + jax.random.uniform(k1, (c,), jnp.float32)
        beta = 0.1 * jax.random.normal(k2, (c,), jnp.float32)
        mean = 0.1 * jax.random.normal(k3, (c,), jnp.float32)
        var = 0.5 + jax.random.uniform(k4, (c,), jnp.float32)
        return (gamma, beta, mean, var)

    params = {
        "conv1_w": 0.1 * jax.random.normal(keys[0], (planes, inplanes, 3, 3), jnp.float32),
        "bn1": bn_params(keys[1], planes),
        "conv2_w": 0.1 * jax.random.normal(keys[2], (planes, planes, 3, 3), jnp.float32),
        "bn2": bn_params(keys[3], planes),
    }
    if stride != 1 or inplanes != planes:
        params["conv_s_w"] = 0.1 * jax.random.normal(
            keys[4], (planes, inplanes, 1, 1), jnp.float32)
        params["bn_s"] = bn_params(keys[5], planes)
    return params


if __name__ == "__main__":
    key = jax.random.PRNGKey(0)
    k_x1, k_p1, k_x2, k_p2 = jax.random.split(key, 4)

    # Case 1: projection shortcut (stride=2, inplanes != planes)
    x1 = jax.random.normal(k_x1, (2, 4, 16, 16), jnp.float32)   # NCHW
    params1 = make_params(k_p1, inplanes=4, planes=8, stride=2)
    y1 = jax.block_until_ready(basic_block_forward(x1, params1, stride=2))
    r1 = basic_block_reference(x1, params1, stride=2)
    assert y1.shape == (2, 8, 8, 8)
    assert float(jnp.max(jnp.abs(y1 - r1))) < 5e-3   # bf16 MXU inputs, f32 acc

    # Case 2: identity shortcut (stride=1, inplanes == planes)
    x2 = jax.random.normal(k_x2, (2, 8, 16, 16), jnp.float32)   # NCHW
    params2 = make_params(k_p2, inplanes=8, planes=8, stride=1)
    y2 = jax.block_until_ready(basic_block_forward(x2, params2, stride=1))
    r2 = basic_block_reference(x2, params2, stride=1)
    assert y2.shape == (2, 8, 16, 16)
    assert float(jnp.max(jnp.abs(y2 - r2))) < 5e-3

    print("KERNEL_OK")
</pallas_src>

<mosaic_0001>
module attributes {stable_mosaic.version = 11 : i64} {
  func.func @_fused_matmul_bias_kernel(%arg0: i32, %arg1: i32, %arg2: i32, %arg3: memref<128x128xbf16, #tpu.memory_space<vmem>>, %arg4: memref<128x128xbf16, #tpu.memory_space<vmem>>, %arg5: memref<1x128xf32, #tpu.memory_space<vmem>>, %arg6: memref<128x128xf32, #tpu.memory_space<vmem>>, %arg7: memref<128x128xf32, #tpu.memory_space<vmem>>) attributes {dimension_semantics = [#tpu.dimension_semantics<parallel>, #tpu.dimension_semantics<parallel>, #tpu.dimension_semantics<arbitrary>], iteration_bounds = array<i64: 1, 1, 1>, scalar_prefetch = 0 : i64, scratch_operands = 1 : i64, tpu.core_type = #tpu.core_type<tc>, window_params = [{transform_indices = @transform_0, window_bounds = array<i64: 128, 128>}, {transform_indices = @transform_1, window_bounds = array<i64: 128, 128>}, {transform_indices = @transform_2, window_bounds = array<i64: 1, 128>}, {transform_indices = @transform_3, window_bounds = array<i64: 128, 128>}]} {
    %c0_i32 = arith.constant 0 : i32
    %0 = arith.cmpi eq, %arg2, %c0_i32 : i32
    %1 = arith.extui %0 : i1 to i32
    %c0_i32_0 = arith.constant 0 : i32
    %2 = arith.cmpi ne, %1, %c0_i32_0 : i32
    scf.if %2 {
      %cst_10 = arith.constant 0.000000e+00 : f32
      %12 = vector.broadcast %cst_10 : f32 to vector<128x128xf32>
      %c0_11 = arith.constant 0 : index
      %c0_12 = arith.constant 0 : index
      %13 = vector.load %arg7[%c0_11, %c0_12] : memref<128x128xf32, #tpu.memory_space<vmem>>, vector<128x128xf32>
      tpu.vector_store %arg7[%c0_11, %c0_12], %12 {strides = array<i32>} : memref<128x128xf32, #tpu.memory_space<vmem>>, vector<128x128xf32>,
    } else {
    }
    %c0 = arith.constant 0 : index
    %c0_1 = arith.constant 0 : index
    %3 = vector.load %arg7[%c0, %c0_1] : memref<128x128xf32, #tpu.memory_space<vmem>>, vector<128x128xf32>
    %c0_2 = arith.constant 0 : index
    %c0_3 = arith.constant 0 : index
    %4 = vector.load %arg3[%c0_2, %c0_3] : memref<128x128xbf16, #tpu.memory_space<vmem>>, vector<128x128xbf16>
    %c0_4 = arith.constant 0 : index
    %c0_5 = arith.constant 0 : index
    %5 = vector.load %arg4[%c0_4, %c0_5] : memref<128x128xbf16, #tpu.memory_space<vmem>>, vector<128x128xbf16>
    %cst = arith.constant dense<0.000000e+00> : vector<128x128xf32>
    %6 = tpu.matmul %4, %5, %cst {dimension_numbers = #tpu.dot_dimension_numbers<[1], [0], [0], [1], [0, 0, 1, 1], [], []>} : vector<128x128xbf16>, vector<128x128xbf16>, vector<128x128xf32> -> vector<128x128xf32>
    %7 = arith.addf %3, %6 : vector<128x128xf32>
    %c0_6 = arith.constant 0 : index
    %c0_7 = arith.constant 0 : index
    %8 = vector.load %arg7[%c0_6, %c0_7] : memref<128x128xf32, #tpu.memory_space<vmem>>, vector<128x128xf32>
    tpu.vector_store %arg7[%c0_6, %c0_7], %7 {strides = array<i32>} : memref<128x128xf32, #tpu.memory_space<vmem>>, vector<128x128xf32>,
    %c0_i32_8 = arith.constant 0 : i32
    %9 = arith.cmpi eq, %arg2, %c0_i32_8 : i32
    %10 = arith.extui %9 : i1 to i32
    %c0_i32_9 = arith.constant 0 : i32
    %11 = arith.cmpi ne, %10, %c0_i32_9 : i32
    scf.if %11 {
      %c0_10 = arith.constant 0 : index
      %c0_11 = arith.constant 0 : index
      %12 = vector.load %arg7[%c0_10, %c0_11] : memref<128x128xf32, #tpu.memory_space<vmem>>, vector<128x128xf32>
      %c0_12 = arith.constant 0 : index
      %c0_13 = arith.constant 0 : index
      %13 = vector.load %arg5[%c0_12, %c0_13] : memref<1x128xf32, #tpu.memory_space<vmem>>, vector<1x128xf32>
      %14 = vector.broadcast %13 : vector<1x128xf32> to vector<128x128xf32>
      %15 = arith.addf %12, %14 : vector<128x128xf32>
      %cst_14 = arith.constant 0.000000e+00 : f32
      %16 = vector.broadcast %cst_14 : f32 to vector<128x128xf32>
      %17 = arith.maximumf %15, %16 : vector<128x128xf32>
      %c0_15 = arith.constant 0 : index
      %c0_16 = arith.constant 0 : index
      %18 = vector.load %arg6[%c0_15, %c0_16] : memref<128x128xf32, #tpu.memory_space<vmem>>, vector<128x128xf32>
      tpu.vector_store %arg6[%c0_15, %c0_16], %17 {strides = array<i32>} : memref<128x128xf32, #tpu.memory_space<vmem>>, vector<128x128xf32>,
    } else {
    }
    return
  }
  func.func @transform_0(%arg0: i32, %arg1: i32, %arg2: i32) -> (i32, i32) {
    %c0_i32 = arith.constant 0 : i32
    return %arg0, %arg2 : i32, i32
  }
  func.func @transform_1(%arg0: i32, %arg1: i32, %arg2: i32) -> (i32, i32) {
    %c0_i32 = arith.constant 0 : i32
    return %arg2, %arg1 : i32, i32
  }
  func.func @transform_2(%arg0: i32, %arg1: i32, %arg2: i32) -> (i32, i32) {
    %c0_i32 = arith.constant 0 : i32
    %c0_i32_0 = arith.constant 0 : i32
    return %c0_i32, %arg1 : i32, i32
  }
  func.func @transform_3(%arg0: i32, %arg1: i32, %arg2: i32) -> (i32, i32) {
    %c0_i32 = arith.constant 0 : i32
    return %arg0, %arg1 : i32, i32
  }
}

module attributes {stable_mosaic.version = 11 : i64} {
  func.func @_fused_matmul_bias_kernel(%arg0: i32, %arg1: i32, %arg2: i32, %arg3: memref<128x128xbf16, #tpu.memory_space<vmem>>, %arg4: memref<128x128xbf16, #tpu.memory_space<vmem>>, %arg5: memref<1x128xf32, #tpu.memory_space<vmem>>, %arg6: memref<128x128xf32, #tpu.memory_space<vmem>>, %arg7: memref<128x128xf32, #tpu.memory_space<vmem>>) attributes {dimension_semantics = [#tpu.dimension_semantics<parallel>, #tpu.dimension_semantics<parallel>, #tpu.dimension_semantics<arbitrary>], iteration_bounds = array<i64: 1, 1, 1>, scalar_prefetch = 0 : i64, scratch_operands = 1 : i64, tpu.core_type = #tpu.core_type<tc>, window_params = [{transform_indices = @transform_0, window_bounds = array<i64: 128, 128>}, {transform_indices = @transform_1, window_bounds = array<i64: 128, 128>}, {transform_indices = @transform_2, window_bounds = array<i64: 1, 128>}, {transform_indices = @transform_3, window_bounds = array<i64: 128, 128>}]} {
    %c0_i32 = arith.constant 0 : i32
    %0 = arith.cmpi eq, %arg2, %c0_i32 : i32
    %1 = arith.extui %0 : i1 to i32
    %c0_i32_0 = arith.constant 0 : i32
    %2 = arith.cmpi ne, %1, %c0_i32_0 : i32
    scf.if %2 {
      %cst_10 = arith.constant 0.000000e+00 : f32
      %12 = vector.broadcast %cst_10 : f32 to vector<128x128xf32>
      %c0_11 = arith.constant 0 : index
      %c0_12 = arith.constant 0 : index
      %13 = vector.load %arg7[%c0_11, %c0_12] : memref<128x128xf32, #tpu.memory_space<vmem>>, vector<128x128xf32>
      tpu.vector_store %arg7[%c0_11, %c0_12], %12 {strides = array<i32>} : memref<128x128xf32, #tpu.memory_space<vmem>>, vector<128x128xf32>,
    } else {
    }
    %c0 = arith.constant 0 : index
    %c0_1 = arith.constant 0 : index
    %3 = vector.load %arg7[%c0, %c0_1] : memref<128x128xf32, #tpu.memory_space<vmem>>, vector<128x128xf32>
    %c0_2 = arith.constant 0 : index
    %c0_3 = arith.constant 0 : index
    %4 = vector.load %arg3[%c0_2, %c0_3] : memref<128x128xbf16, #tpu.memory_space<vmem>>, vector<128x128xbf16>
    %c0_4 = arith.constant 0 : index
    %c0_5 = arith.constant 0 : index
    %5 = vector.load %arg4[%c0_4, %c0_5] : memref<128x128xbf16, #tpu.memory_space<vmem>>, vector<128x128xbf16>
    %cst = arith.constant dense<0.000000e+00> : vector<128x128xf32>
    %6 = tpu.matmul %4, %5, %cst {dimension_numbers = #tpu.dot_dimension_numbers<[1], [0], [0], [1], [0, 0, 1, 1], [], []>} : vector<128x128xbf16>, vector<128x128xbf16>, vector<128x128xf32> -> vector<128x128xf32>
    %7 = arith.addf %3, %6 : vector<128x128xf32>
    %c0_6 = arith.constant 0 : index
    %c0_7 = arith.constant 0 : index
    %8 = vector.load %arg7[%c0_6, %c0_7] : memref<128x128xf32, #tpu.memory_space<vmem>>, vector<128x128xf32>
    tpu.vector_store %arg7[%c0_6, %c0_7], %7 {strides = array<i32>} : memref<128x128xf32, #tpu.memory_space<vmem>>, vector<128x128xf32>,
    %c0_i32_8 = arith.constant 0 : i32
    %9 = arith.cmpi eq, %arg2, %c0_i32_8 : i32
    %10 = arith.extui %9 : i1 to i32
    %c0_i32_9 = arith.constant 0 : i32
    %11 = arith.cmpi ne, %10, %c0_i32_9 : i32
    scf.if %11 {
      %c0_10 = arith.constant 0 : index
      %c0_11 = arith.constant 0 : index
      %12 = vector.load %arg7[%c0_10, %c0_11] : memref<128x128xf32, #tpu.memory_space<vmem>>, vector<128x128xf32>
      %c0_12 = arith.constant 0 : index
      %c0_13 = arith.constant 0 : index
      %13 = vector.load %arg5[%c0_12, %c0_13] : memref<1x128xf32, #tpu.memory_space<vmem>>, vector<1x128xf32>
      %14 = vector.broadcast %13 : vector<1x128xf32> to vector<128x128xf32>
      %15 = arith.addf %12, %14 : vector<128x128xf32>
      %c0_14 = arith.constant 0 : index
      %c0_15 = arith.constant 0 : index
      %16 = vector.load %arg6[%c0_14, %c0_15] : memref<128x128xf32, #tpu.memory_space<vmem>>, vector<128x128xf32>
      tpu.vector_store %arg6[%c0_14, %c0_15], %15 {strides = array<i32>} : memref<128x128xf32, #tpu.memory_space<vmem>>, vector<128x128xf32>,
    } else {
    }
    return
  }
  func.func @transform_0(%arg0: i32, %arg1: i32, %arg2: i32) -> (i32, i32) {
    %c0_i32 = arith.constant 0 : i32
    return %arg0, %arg2 : i32, i32
  }
  func.func @transform_1(%arg0: i32, %arg1: i32, %arg2: i32) -> (i32, i32) {
    %c0_i32 = arith.constant 0 : i32
    return %arg2, %arg1 : i32, i32
  }
  func.func @transform_2(%arg0: i32, %arg1: i32, %arg2: i32) -> (i32, i32) {
    %c0_i32 = arith.constant 0 : i32
    %c0_i32_0 = arith.constant 0 : i32
    return %c0_i32, %arg1 : i32, i32
  }
  func.func @transform_3(%arg0: i32, %arg1: i32, %arg2: i32) -> (i32, i32) {
    %c0_i32 = arith.constant 0 : i32
    return %arg0, %arg1 : i32, i32
  }
}

module attributes {stable_mosaic.version = 11 : i64} {
  func.func @_fused_matmul_bias_kernel(%arg0: i32, %arg1: i32, %arg2: i32, %arg3: memref<128x128xbf16, #tpu.memory_space<vmem>>, %arg4: memref<128x128xbf16, #tpu.memory_space<vmem>>, %arg5: memref<1x128xf32, #tpu.memory_space<vmem>>, %arg6: memref<128x128xf32, #tpu.memory_space<vmem>>, %arg7: memref<128x128xf32, #tpu.memory_space<vmem>>, %arg8: memref<128x128xf32, #tpu.memory_space<vmem>>) attributes {dimension_semantics = [#tpu.dimension_semantics<parallel>, #tpu.dimension_semantics<parallel>, #tpu.dimension_semantics<arbitrary>], iteration_bounds = array<i64: 1, 1, 1>, scalar_prefetch = 0 : i64, scratch_operands = 1 : i64, tpu.core_type = #tpu.core_type<tc>, window_params = [{transform_indices = @transform_0, window_bounds = array<i64: 128, 128>}, {transform_indices = @transform_1, window_bounds = array<i64: 128, 128>}, {transform_indices = @transform_2, window_bounds = array<i64: 1, 128>}, {transform_indices = @transform_3, window_bounds = array<i64: 128, 128>}, {transform_indices = @transform_4, window_bounds = array<i64: 128, 128>}]} {
    %c0_i32 = arith.constant 0 : i32
    %0 = arith.cmpi eq, %arg2, %c0_i32 : i32
    %1 = arith.extui %0 : i1 to i32
    %c0_i32_0 = arith.constant 0 : i32
    %2 = arith.cmpi ne, %1, %c0_i32_0 : i32
    scf.if %2 {
      %cst_10 = arith.constant 0.000000e+00 : f32
      %12 = vector.broadcast %cst_10 : f32 to vector<128x128xf32>
      %c0_11 = arith.constant 0 : index
      %c0_12 = arith.constant 0 : index
      %13 = vector.load %arg8[%c0_11, %c0_12] : memref<128x128xf32, #tpu.memory_space<vmem>>, vector<128x128xf32>
      tpu.vector_store %arg8[%c0_11, %c0_12], %12 {strides = array<i32>} : memref<128x128xf32, #tpu.memory_space<vmem>>, vector<128x128xf32>,
    } else {
    }
    %c0 = arith.constant 0 : index
    %c0_1 = arith.constant 0 : index
    %3 = vector.load %arg8[%c0, %c0_1] : memref<128x128xf32, #tpu.memory_space<vmem>>, vector<128x128xf32>
    %c0_2 = arith.constant 0 : index
    %c0_3 = arith.constant 0 : index
    %4 = vector.load %arg3[%c0_2, %c0_3] : memref<128x128xbf16, #tpu.memory_space<vmem>>, vector<128x128xbf16>
    %c0_4 = arith.constant 0 : index
    %c0_5 = arith.constant 0 : index
    %5 = vector.load %arg4[%c0_4, %c0_5] : memref<128x128xbf16, #tpu.memory_space<vmem>>, vector<128x128xbf16>
    %cst = arith.constant dense<0.000000e+00> : vector<128x128xf32>
    %6 = tpu.matmul %4, %5, %cst {dimension_numbers = #tpu.dot_dimension_numbers<[1], [0], [0], [1], [0, 0, 1, 1], [], []>} : vector<128x128xbf16>, vector<128x128xbf16>, vector<128x128xf32> -> vector<128x128xf32>
    %7 = arith.addf %3, %6 : vector<128x128xf32>
    %c0_6 = arith.constant 0 : index
    %c0_7 = arith.constant 0 : index
    %8 = vector.load %arg8[%c0_6, %c0_7] : memref<128x128xf32, #tpu.memory_space<vmem>>, vector<128x128xf32>
    tpu.vector_store %arg8[%c0_6, %c0_7], %7 {strides = array<i32>} : memref<128x128xf32, #tpu.memory_space<vmem>>, vector<128x128xf32>,
    %c0_i32_8 = arith.constant 0 : i32
    %9 = arith.cmpi eq, %arg2, %c0_i32_8 : i32
    %10 = arith.extui %9 : i1 to i32
    %c0_i32_9 = arith.constant 0 : i32
    %11 = arith.cmpi ne, %10, %c0_i32_9 : i32
    scf.if %11 {
      %c0_10 = arith.constant 0 : index
      %c0_11 = arith.constant 0 : index
      %12 = vector.load %arg8[%c0_10, %c0_11] : memref<128x128xf32, #tpu.memory_space<vmem>>, vector<128x128xf32>
      %c0_12 = arith.constant 0 : index
      %c0_13 = arith.constant 0 : index
      %13 = vector.load %arg5[%c0_12, %c0_13] : memref<1x128xf32, #tpu.memory_space<vmem>>, vector<1x128xf32>
      %14 = vector.broadcast %13 : vector<1x128xf32> to vector<128x128xf32>
      %15 = arith.addf %12, %14 : vector<128x128xf32>
      %c0_14 = arith.constant 0 : index
      %c0_15 = arith.constant 0 : index
      %16 = vector.load %arg6[%c0_14, %c0_15] : memref<128x128xf32, #tpu.memory_space<vmem>>, vector<128x128xf32>
      %17 = arith.addf %15, %16 : vector<128x128xf32>
      %cst_16 = arith.constant 0.000000e+00 : f32
      %18 = vector.broadcast %cst_16 : f32 to vector<128x128xf32>
      %19 = arith.maximumf %17, %18 : vector<128x128xf32>
      %c0_17 = arith.constant 0 : index
      %c0_18 = arith.constant 0 : index
      %20 = vector.load %arg7[%c0_17, %c0_18] : memref<128x128xf32, #tpu.memory_space<vmem>>, vector<128x128xf32>
      tpu.vector_store %arg7[%c0_17, %c0_18], %19 {strides = array<i32>} : memref<128x128xf32, #tpu.memory_space<vmem>>, vector<128x128xf32>,
    } else {
    }
    return
  }
  func.func @transform_0(%arg0: i32, %arg1: i32, %arg2: i32) -> (i32, i32) {
    %c0_i32 = arith.constant 0 : i32
    return %arg0, %arg2 : i32, i32
  }
  func.func @transform_1(%arg0: i32, %arg1: i32, %arg2: i32) -> (i32, i32) {
    %c0_i32 = arith.constant 0 : i32
    return %arg2, %arg1 : i32, i32
  }
  func.func @transform_2(%arg0: i32, %arg1: i32, %arg2: i32) -> (i32, i32) {
    %c0_i32 = arith.constant 0 : i32
    %c0_i32_0 = arith.constant 0 : i32
    return %c0_i32, %arg1 : i32, i32
  }
  func.func @transform_3(%arg0: i32, %arg1: i32, %arg2: i32) -> (i32, i32) {
    %c0_i32 = arith.constant 0 : i32
    return %arg0, %arg1 : i32, i32
  }
  func.func @transform_4(%arg0: i32, %arg1: i32, %arg2: i32) -> (i32, i32) {
    %c0_i32 = arith.constant 0 : i32
    return %arg0, %arg1 : i32, i32
  }
}

</mosaic_0001>

<llo_original>
// kernel: basic_block_forward.3
$region0: #{basic_block_forward.3}
  #allocation0 [shape = 'u32[]', space=smem, size = 0x4, offset = 0x4, fixed_abs, tag = 'smem constant byte address 0x4 - core index']
  #allocation1 [shape = 'u32[144,128]{1,0:T(1,128)}', space=vmem, size = 0x12000, scoped, tag = 'internal scratch']
  #allocation2 [shape = 'f32[128,128]{1,0:T(8,128)}', space=vmem, size = 0x10000, scoped, tag = 'scratch operand']
  %s0 = inlined_call_operand.vmem [shape: bf16[128,128], index: 0, kind: input, shape index: {}]
  %s1 = inlined_call_operand.vmem [shape: bf16[128,128], index: 1, kind: input, shape index: {}]
  %s2 = inlined_call_operand.vmem [shape: f32[1,128], index: 2, kind: input, shape index: {}]
  %s3 = inlined_call_operand.vmem [shape: f32[128,128], index: 3, kind: output, shape index: {}]
  %s4 = sld [smem:[#allocation0]]
  $region30: #{basic_block_forward.3} parent=0
    _
  %s6 = ssub.s32 1, %s4
  %s7 = scalar_select 0, %s6, %s4
  // Predicated region
  $region2: #{basic_block_forward.3} parent=0 // pred_check
    _
  $region3: #{basic_block_forward.3} parent=0 // pred_check_branch
    %9 = sbr.rel (0) target = $region5
  $region4: #{basic_block_forward.3} parent=0 // pred_region
    _
  $region5: #{basic_block_forward.3} parent=0 // pred_fallthru
    _
  // Predicated region
  $region6: #{basic_block_forward.3} parent=0 // pred_check
    _
  $region7: #{basic_block_forward.3} parent=0 // pred_check_branch
    %11 = sbr.rel (0) target = $region9
  $region8: #{basic_block_forward.3} parent=0 // pred_region
    _
  $region9: #{basic_block_forward.3} parent=0 // pred_fallthru
    _
  // Predicated region
  $region10: #{basic_block_forward.3} parent=0 // pred_check
    _
  $region11: #{basic_block_forward.3} parent=0 // pred_check_branch
    %13 = sbr.rel (0) target = $region13
  $region12: #{basic_block_forward.3} parent=0 // pred_region
    _
  $region13: #{basic_block_forward.3} parent=0 // pred_fallthru
    _
  %p15 = scmp.eq.s32.totalorder 0, 0
  // Predicated region
  $region14: #{basic_block_forward.3} parent=0 // pred_check
    %p16 = pneg %p15
  $region15: #{basic_block_forward.3} parent=0 // pred_check_branch
    %18 = sbr.rel (%p16) target = $region17
  $region16: #{basic_block_forward.3} parent=0 // pred_region
    %19 = vst [vmem:[#allocation2] sm:$0xff] 0.0
    %20 = vst [vmem:[#allocation2 + $0x8] sm:$0xff] 0.0
    %21 = vst [vmem:[#allocation2 + $0x10] sm:$0xff] 0.0
    %22 = vst [vmem:[#allocation2 + $0x18] sm:$0xff] 0.0
    %23 = vst [vmem:[#allocation2 + $0x20] sm:$0xff] 0.0
    %24 = vst [vmem:[#allocation2 + $0x28] sm:$0xff] 0.0
    %25 = vst [vmem:[#allocation2 + $0x30] sm:$0xff] 0.0
    %26 = vst [vmem:[#allocation2 + $0x38] sm:$0xff] 0.0
    %27 = vst [vmem:[#allocation2 + $0x40] sm:$0xff] 0.0
    %28 = vst [vmem:[#allocation2 + $0x48] sm:$0xff] 0.0
    %29 = vst [vmem:[#allocation2 + $0x50] sm:$0xff] 0.0
    %30 = vst [vmem:[#allocation2 + $0x58] sm:$0xff] 0.0
    %31 = vst [vmem:[#allocation2 + $0x60] sm:$0xff] 0.0
    %32 = vst [vmem:[#allocation2 + $0x68] sm:$0xff] 0.0
    %33 = vst [vmem:[#allocation2 + $0x70] sm:$0xff] 0.0
    %34 = vst [vmem:[#allocation2 + $0x78] sm:$0xff] 0.0
  $region17: #{basic_block_forward.3} parent=0 // pred_fallthru
    _
  %v35 = vld [vmem:[#allocation2] sm:$0xff]
  %v36 = vld [vmem:[#allocation2 + $0x8] sm:$0xff]
  %v37 = vld [vmem:[#allocation2 + $0x10] sm:$0xff]
  %v38 = vld [vmem:[#allocation2 + $0x18] sm:$0xff]
  %v39 = vld [vmem:[#allocation2 + $0x20] sm:$0xff]
  %v40 = vld [vmem:[#allocation2 + $0x28] sm:$0xff]
  %v41 = vld [vmem:[#allocation2 + $0x30] sm:$0xff]
  %v42 = vld [vmem:[#allocation2 + $0x38] sm:$0xff]
  %v43 = vld [vmem:[#allocation2 + $0x40] sm:$0xff]
  %v44 = vld [vmem:[#allocation2 + $0x48] sm:$0xff]
  %v45 = vld [vmem:[#allocation2 + $0x50] sm:$0xff]
  %v46 = vld [vmem:[#allocation2 + $0x58] sm:$0xff]
  %v47 = vld [vmem:[#allocation2 + $0x60] sm:$0xff]
  %v48 = vld [vmem:[#allocation2 + $0x68] sm:$0xff]
  %v49 = vld [vmem:[#allocation2 + $0x70] sm:$0xff]
  %v50 = vld [vmem:[#allocation2 + $0x78] sm:$0xff]
  %v51 = vld [vmem:[%s0] sm:$0xf]
  %v52 = vld [vmem:[%s0 + $0x4] sm:$0xf]
  %v53 = vld [vmem:[%s0 + $0x8] sm:$0xf]
  %v54 = vld [vmem:[%s0 + $0xc] sm:$0xf]
  %v55 = vld [vmem:[%s0 + $0x10] sm:$0xf]
  %v56 = vld [vmem:[%s0 + $0x14] sm:$0xf]
  %v57 = vld [vmem:[%s0 + $0x18] sm:$0xf]
  %v58 = vld [vmem:[%s0 + $0x1c] sm:$0xf]
  %v59 = vld [vmem:[%s0 + $0x20] sm:$0xf]
  %v60 = vld [vmem:[%s0 + $0x24] sm:$0xf]
  %v61 = vld [vmem:[%s0 + $0x28] sm:$0xf]
  %v62 = vld [vmem:[%s0 + $0x2c] sm:$0xf]
  %v63 = vld [vmem:[%s0 + $0x30] sm:$0xf]
  %v64 = vld [vmem:[%s0 + $0x34] sm:$0xf]
  %v65 = vld [vmem:[%s0 + $0x38] sm:$0xf]
  %v66 = vld [vmem:[%s0 + $0x3c] sm:$0xf]
  %v67 = vld [vmem:[%s1] sm:$0xf]
  %v68 = vld [vmem:[%s1 + $0x4] sm:$0xf]
  %v69 = vld [vmem:[%s1 + $0x8] sm:$0xf]
  %v70 = vld [vmem:[%s1 + $0xc] sm:$0xf]
  %v71 = vld [vmem:[%s1 + $0x10] sm:$0xf]
  %v72 = vld [vmem:[%s1 + $0x14] sm:$0xf]
  %v73 = vld [vmem:[%s1 + $0x18] sm:$0xf]
  %v74 = vld [vmem:[%s1 + $0x1c] sm:$0xf]
  %v75 = vld [vmem:[%s1 + $0x20] sm:$0xf]
  %v76 = vld [vmem:[%s1 + $0x24] sm:$0xf]
  %v77 = vld [vmem:[%s1 + $0x28] sm:$0xf]
  %v78 = vld [vmem:[%s1 + $0x2c] sm:$0xf]
  %v79 = vld [vmem:[%s1 + $0x30] sm:$0xf]
  %v80 = vld [vmem:[%s1 + $0x34] sm:$0xf]
  %v81 = vld [vmem:[%s1 + $0x38] sm:$0xf]
  %v82 = vld [vmem:[%s1 + $0x3c] sm:$0xf]
  %v99 = vunpack.c.l.b16 %v51
  %v100 = vunpack.c.l.b16 %v52
  %v101 = vunpack.c.l.b16 %v53
  %v102 = vunpack.c.l.b16 %v54
  %v103 = vunpack.c.l.b16 %v55
  %v104 = vunpack.c.l.b16 %v56
  %v105 = vunpack.c.l.b16 %v57
  %v106 = vunpack.c.l.b16 %v58
  %v107 = vunpack.c.l.b16 %v59
  %v108 = vunpack.c.l.b16 %v60
  %v109 = vunpack.c.l.b16 %v61
  %v110 = vunpack.c.l.b16 %v62
  %v111 = vunpack.c.l.b16 %v63
  %v112 = vunpack.c.l.b16 %v64
  %v113 = vunpack.c.l.b16 %v65
  %v114 = vunpack.c.l.b16 %v66
  %v115 = vpack.c.b16 %v100, %v99
  %v116 = vpack.c.b16 %v102, %v101
  %v117 = vpack.c.b16 %v104, %v103
  %v118 = vpack.c.b16 %v106, %v105
  %v119 = vpack.c.b16 %v108, %v107
  %v120 = vpack.c.b16 %v110, %v109
  %v121 = vpack.c.b16 %v112, %v111
  %v122 = vpack.c.b16 %v114, %v113
  %v147 = vunpack.c.l.b16 %v67
  %v148 = vunpack.c.l.b16 %v68
  %v149 = vunpack.c.l.b16 %v69
  %v150 = vunpack.c.l.b16 %v70
  %v151 = vunpack.c.l.b16 %v71
  %v152 = vunpack.c.l.b16 %v72
  %v153 = vunpack.c.l.b16 %v73
  %v154 = vunpack.c.l.b16 %v74
  %v155 = vunpack.c.l.b16 %v75
  %v156 = vunpack.c.l.b16 %v76
  %v157 = vunpack.c.l.b16 %v77
  %v158 = vunpack.c.l.b16 %v78
  %v159 = vunpack.c.l.b16 %v79
  %v160 = vunpack.c.l.b16 %v80
  %v161 = vunpack.c.l.b16 %v81
  %v162 = vunpack.c.l.b16 %v82
  %v163 = vpack.c.b16 %v148, %v147
  %v164 = vpack.c.b16 %v150, %v149
  %v165 = vpack.c.b16 %v152, %v151
  %v166 = vpack.c.b16 %v154, %v153
  %v167 = vpack.c.b16 %v156, %v155
  %v168 = vpack.c.b16 %v158, %v157
  %v169 = vpack.c.b16 %v160, %v159
  %v170 = vpack.c.b16 %v162, %v161
  %179 = vmatprep.subr.bf16.mxu0 0
  %180 = vmatpush1.bf16.msra.mxu0 %v170
  %181 = vmatprep.subr.bf16.mxu0 0
  %182 = vmatpush1.bf16.msra.mxu0 %v169
  %183 = vmatprep.subr.bf16.mxu0 0
  %184 = vmatpush1.bf16.msra.mxu0 %v168
  %185 = vmatprep.subr.bf16.mxu0 0
  %186 = vmatpush1.bf16.msra.mxu0 %v167
  %187 = vmatprep.subr.bf16.mxu0 0
  %188 = vmatpush1.bf16.msra.mxu0 %v166
  %189 = vmatprep.subr.bf16.mxu0 0
  %190 = vmatpush1.bf16.msra.mxu0 %v165
  %191 = vmatprep.subr.bf16.mxu0 0
  %192 = vmatpush1.bf16.msra.mxu0 %v164
  %193 = vmatprep.subr.bf16.mxu0 0
  %194 = vmatpush1.bf16.msra.mxu0 %v163
  %195 = vmatprep.subr.bf16.mxu0 0
  %196 = vmatpush2.bf16.msra.mxu0 0
  %197 = vmatprep.subr.bf16.mxu0 0
  %198 = vmatpush2.bf16.msra.mxu0 0
  %199 = vmatprep.subr.bf16.mxu0 0
  %200 = vmatpush2.bf16.msra.mxu0 0
  %201 = vmatprep.subr.bf16.mxu0 0
  %202 = vmatpush2.bf16.msra.mxu0 0
  %203 = vmatprep.subr.bf16.mxu0 0
  %204 = vmatpush2.bf16.msra.mxu0 0
  %205 = vmatprep.subr.bf16.mxu0 0
  %206 = vmatpush2.bf16.msra.mxu0 0
  %207 = vmatprep.subr.bf16.mxu0 0
  %208 = vmatpush2.bf16.msra.mxu0 0
  %209 = vmatprep.subr.bf16.mxu0 0
  %210 = vmatpush2.bf16.msra.mxu0 0
  %211 = vmatprep.mubr.bf16.mxu0 0
  %212 = vmatmul.mubr.bf16.gmra.mxu0 %v115
  %v213 = vpop.f32.mrf.mxu0
  %v214 = vadd.f32 0.0, %v213
  %v215 = vpop.f32.mrf.mxu0
  %v216 = vpop.f32.mrf.mxu0
  %v217 = vadd.f32 0.0, %v216
  %v218 = vpop.f32.mrf.mxu0
  %219 = vmatprep.mubr.bf16.mxu0 0
  %220 = vmatmul.mubr.bf16.gmra.mxu0 %v116
  %v221 = vpop.f32.mrf.mxu0
  %v222 = vadd.f32 0.0, %v221
  %v223 = vpop.f32.mrf.mxu0
  %v224 = vpop.f32.mrf.mxu0
  %v225 = vadd.f32 0.0, %v224
  %v226 = vpop.f32.mrf.mxu0
  %227 = vmatprep.mubr.bf16.mxu0 0
  %228 = vmatmul.mubr.bf16.gmra.mxu0 %v117
  %v229 = vpop.f32.mrf.mxu0
  %v230 = vadd.f32 0.0, %v229
  %v231 = vpop.f32.mrf.mxu0
  %v232 = vpop.f32.mrf.mxu0
  %v233 = vadd.f32 0.0, %v232
  %v234 = vpop.f32.mrf.mxu0
  %235 = vmatprep.mubr.bf16.mxu0 0
  %236 = vmatmul.mubr.bf16.gmra.mxu0 %v118
  %v237 = vpop.f32.mrf.mxu0
  %v238 = vadd.f32 0.0, %v237
  %v239 = vpop.f32.mrf.mxu0
  %v240 = vpop.f32.mrf.mxu0
  %v241 = vadd.f32 0.0, %v240
  %v242 = vpop.f32.mrf.mxu0
  %243 = vmatprep.mubr.bf16.mxu0 0
  %244 = vmatmul.mubr.bf16.gmra.mxu0 %v119
  %v245 = vpop.f32.mrf.mxu0
  %v246 = vadd.f32 0.0, %v245
  %v247 = vpop.f32.mrf.mxu0
  %v248 = vpop.f32.mrf.mxu0
  %v249 = vadd.f32 0.0, %v248
  %v250 = vpop.f32.mrf.mxu0
  %251 = vmatprep.mubr.bf16.mxu0 0
  %252 = vmatmul.mubr.bf16.gmra.mxu0 %v120
  %v253 = vpop.f32.mrf.mxu0
  %v254 = vadd.f32 0.0, %v253
  %v255 = vpop.f32.mrf.mxu0
  %v256 = vpop.f32.mrf.mxu0
  %v257 = vadd.f32 0.0, %v256
  %v258 = vpop.f32.mrf.mxu0
  %259 = vmatprep.mubr.bf16.mxu0 0
  %260 = vmatmul.mubr.bf16.gmra.mxu0 %v121
  %v261 = vpop.f32.mrf.mxu0
  %v262 = vadd.f32 0.0, %v261
  %v263 = vpop.f32.mrf.mxu0
  %v264 = vpop.f32.mrf.mxu0
  %v265 = vadd.f32 0.0, %v264
  %v266 = vpop.f32.mrf.mxu0
  %267 = vmatprep.mubr.bf16.mxu0 0
  %268 = vmatmul.mubr.bf16.gmra.mxu0 %v122
  %v269 = vpop.f32.mrf.mxu0
  %v270 = vadd.f32 0.0, %v269
  %v271 = vpop.f32.mrf.mxu0
  %v272 = vpop.f32.mrf.mxu0
  %v273 = vadd.f32 0.0, %v272
  %v274 = vpop.f32.mrf.mxu0
  %275 = vdwg.mxu0
  %v276 = vadd.f32 %v35, %v214
  %v277 = vadd.f32 %v36, %v217
  %v278 = vadd.f32 %v37, %v222
  %v279 = vadd.f32 %v38, %v225
  %v280 = vadd.f32 %v39, %v230
  %v281 = vadd.f32 %v40, %v233
  %v282 = vadd.f32 %v41, %v238
  %v283 = vadd.f32 %v42, %v241
  %v284 = vadd.f32 %v43, %v246
  %v285 = vadd.f32 %v44, %v249
  %v286 = vadd.f32 %v45, %v254
  %v287 = vadd.f32 %v46, %v257
  %v288 = vadd.f32 %v47, %v262
  %v289 = vadd.f32 %v48, %v265
  %v290 = vadd.f32 %v49, %v270
  %v291 = vadd.f32 %v50, %v273
  %292 = vst [vmem:[#allocation2] sm:$0xff] %v276
  %293 = vst [vmem:[#allocation2 + $0x8] sm:$0xff] %v277
  %294 = vst [vmem:[#allocation2 + $0x10] sm:$0xff] %v278
  %295 = vst [vmem:[#allocation2 + $0x18] sm:$0xff] %v279
  %296 = vst [vmem:[#allocation2 + $0x20] sm:$0xff] %v280
  %297 = vst [vmem:[#allocation2 + $0x28] sm:$0xff] %v281
  %298 = vst [vmem:[#allocation2 + $0x30] sm:$0xff] %v282
  %299 = vst [vmem:[#allocation2 + $0x38] sm:$0xff] %v283
  %300 = vst [vmem:[#allocation2 + $0x40] sm:$0xff] %v284
  %301 = vst [vmem:[#allocation2 + $0x48] sm:$0xff] %v285
  %302 = vst [vmem:[#allocation2 + $0x50] sm:$0xff] %v286
  %303 = vst [vmem:[#allocation2 + $0x58] sm:$0xff] %v287
  %304 = vst [vmem:[#allocation2 + $0x60] sm:$0xff] %v288
  %305 = vst [vmem:[#allocation2 + $0x68] sm:$0xff] %v289
  %306 = vst [vmem:[#allocation2 + $0x70] sm:$0xff] %v290
  %307 = vst [vmem:[#allocation2 + $0x78] sm:$0xff] %v291
  // Predicated region
  $region18: #{basic_block_forward.3} parent=0 // pred_check
    %p308 = pneg %p15
  $region19: #{basic_block_forward.3} parent=0 // pred_check_branch
    %310 = sbr.rel (%p308) target = $region21
  $region20: #{basic_block_forward.3} parent=0 // pred_region
    %v311 = vld [vmem:[#allocation2] sm:$0xff]
    %v312 = vld [vmem:[#allocation2 + $0x8] sm:$0xff]
    %v313 = vld [vmem:[#allocation2 + $0x10] sm:$0xff]
    %v314 = vld [vmem:[#allocation2 + $0x18] sm:$0xff]
    %v315 = vld [vmem:[#allocation2 + $0x20] sm:$0xff]
    %v316 = vld [vmem:[#allocation2 + $0x28] sm:$0xff]
    %v317 = vld [vmem:[#allocation2 + $0x30] sm:$0xff]
    %v318 = vld [vmem:[#allocation2 + $0x38] sm:$0xff]
    %v319 = vld [vmem:[#allocation2 + $0x40] sm:$0xff]
    %v320 = vld [vmem:[#allocation2 + $0x48] sm:$0xff]
    %v321 = vld [vmem:[#allocation2 + $0x50] sm:$0xff]
    %v322 = vld [vmem:[#allocation2 + $0x58] sm:$0xff]
    %v323 = vld [vmem:[#allocation2 + $0x60] sm:$0xff]
    %v324 = vld [vmem:[#allocation2 + $0x68] sm:$0xff]
    %v325 = vld [vmem:[#allocation2 + $0x70] sm:$0xff]
    %v326 = vld [vmem:[#allocation2 + $0x78] sm:$0xff]
    %v327 = vld [vmem:[%s2] sm:$0x1]
    %v329 = vlaneseq
    %v330 = vshrl.u32 %v329, 7
    %v331 = vsub.s32 0, %v330
    %v332 = vrot.slane %v327, %v331
    %v334 = vadd.f32 %v311, %v332
    %v335 = vadd.f32 %v312, %v332
    %v336 = vadd.f32 %v313, %v332
    %v337 = vadd.f32 %v314, %v332
    %v338 = vadd.f32 %v315, %v332
    %v339 = vadd.f32 %v316, %v332
    %v340 = vadd.f32 %v317, %v332
    %v341 = vadd.f32 %v318, %v332
    %v342 = vadd.f32 %v319, %v332
    %v343 = vadd.f32 %v320, %v332
    %v344 = vadd.f32 %v321, %v332
    %v345 = vadd.f32 %v322, %v332
    %v346 = vadd.f32 %v323, %v332
    %v347 = vadd.f32 %v324, %v332
    %v348 = vadd.f32 %v325, %v332
    %v349 = vadd.f32 %v326, %v332
    %v350 = vmax.f32 %v334, 0.0
    %v351 = vmax.f32 %v335, 0.0
    %v352 = vmax.f32 %v336, 0.0
    %v353 = vmax.f32 %v337, 0.0
    %v354 = vmax.f32 %v338, 0.0
    %v355 = vmax.f32 %v339, 0.0
    %v356 = vmax.f32 %v340, 0.0
    %v357 = vmax.f32 %v341, 0.0
    %v358 = vmax.f32 %v342, 0.0
    %v359 = vmax.f32 %v343, 0.0
    %v360 = vmax.f32 %v344, 0.0
    %v361 = vmax.f32 %v345, 0.0
    %v362 = vmax.f32 %v346, 0.0
    %v363 = vmax.f32 %v347, 0.0
    %v364 = vmax.f32 %v348, 0.0
    %v365 = vmax.f32 %v349, 0.0
    %366 = vst [vmem:[%s3] sm:$0xff] %v350
    %367 = vst [vmem:[%s3 + $0x8] sm:$0xff] %v351
    %368 = vst [vmem:[%s3 + $0x10] sm:$0xff] %v352
    %369 = vst [vmem:[%s3 + $0x18] sm:$0xff] %v353
    %370 = vst [vmem:[%s3 + $0x20] sm:$0xff] %v354
    %371 = vst [vmem:[%s3 + $0x28] sm:$0xff] %v355
    %372 = vst [vmem:[%s3 + $0x30] sm:$0xff] %v356
    %373 = vst [vmem:[%s3 + $0x38] sm:$0xff] %v357
    %374 = vst [vmem:[%s3 + $0x40] sm:$0xff] %v358
    %375 = vst [vmem:[%s3 + $0x48] sm:$0xff] %v359
    %376 = vst [vmem:[%s3 + $0x50] sm:$0xff] %v360
    %377 = vst [vmem:[%s3 + $0x58] sm:$0xff] %v361
    %378 = vst [vmem:[%s3 + $0x60] sm:$0xff] %v362
    %379 = vst [vmem:[%s3 + $0x68] sm:$0xff] %v363
    %380 = vst [vmem:[%s3 + $0x70] sm:$0xff] %v364
    %381 = vst [vmem:[%s3 + $0x78] sm:$0xff] %v365
  $region21: #{basic_block_forward.3} parent=0 // pred_fallthru
    _
  // Predicated region
  $region22: #{basic_block_forward.3} parent=0 // pred_check
    _
  $region23: #{basic_block_forward.3} parent=0 // pred_check_branch
    %383 = sbr.rel (0) target = $region25
  $region24: #{basic_block_forward.3} parent=0 // pred_region
    _
  $region25: #{basic_block_forward.3} parent=0 // pred_fallthru
    _
  // Predicated region
  $region26: #{basic_block_forward.3} parent=0 // pred_check
    _
  $region27: #{basic_block_forward.3} parent=0 // pred_check_branch
    %385 = sbr.rel (0) target = $region29
  $region28: #{basic_block_forward.3} parent=0 // pred_region
    _
  $region29: #{basic_block_forward.3} parent=0 // pred_fallthru
    _

// kernel: basic_block_forward.4
$region0: #{basic_block_forward.4}
  #allocation0 [shape = 'u32[]', space=smem, size = 0x4, offset = 0x4, fixed_abs, tag = 'smem constant byte address 0x4 - core index']
  #allocation1 [shape = 'u32[144,128]{1,0:T(1,128)}', space=vmem, size = 0x12000, scoped, tag = 'internal scratch']
  #allocation2 [shape = 'f32[128,128]{1,0:T(8,128)}', space=vmem, size = 0x10000, scoped, tag = 'scratch operand']
  %s0 = inlined_call_operand.vmem [shape: bf16[128,128], index: 0, kind: input, shape index: {}]
  %s1 = inlined_call_operand.vmem [shape: bf16[128,128], index: 1, kind: input, shape index: {}]
  %s2 = inlined_call_operand.vmem [shape: f32[1,128], index: 2, kind: input, shape index: {}]
  %s3 = inlined_call_operand.vmem [shape: f32[128,128], index: 3, kind: output, shape index: {}]
  %s4 = sld [smem:[#allocation0]]
  $region30: #{basic_block_forward.4} parent=0
    _
  %s6 = ssub.s32 1, %s4
  %s7 = scalar_select 0, %s6, %s4
  // Predicated region
  $region2: #{basic_block_forward.4} parent=0 // pred_check
    _
  $region3: #{basic_block_forward.4} parent=0 // pred_check_branch
    %9 = sbr.rel (0) target = $region5
  $region4: #{basic_block_forward.4} parent=0 // pred_region
    _
  $region5: #{basic_block_forward.4} parent=0 // pred_fallthru
    _
  // Predicated region
  $region6: #{basic_block_forward.4} parent=0 // pred_check
    _
  $region7: #{basic_block_forward.4} parent=0 // pred_check_branch
    %11 = sbr.rel (0) target = $region9
  $region8: #{basic_block_forward.4} parent=0 // pred_region
    _
  $region9: #{basic_block_forward.4} parent=0 // pred_fallthru
    _
  // Predicated region
  $region10: #{basic_block_forward.4} parent=0 // pred_check
    _
  $region11: #{basic_block_forward.4} parent=0 // pred_check_branch
    %13 = sbr.rel (0) target = $region13
  $region12: #{basic_block_forward.4} parent=0 // pred_region
    _
  $region13: #{basic_block_forward.4} parent=0 // pred_fallthru
    _
  %p15 = scmp.eq.s32.totalorder 0, 0
  // Predicated region
  $region14: #{basic_block_forward.4} parent=0 // pred_check
    %p16 = pneg %p15
  $region15: #{basic_block_forward.4} parent=0 // pred_check_branch
    %18 = sbr.rel (%p16) target = $region17
  $region16: #{basic_block_forward.4} parent=0 // pred_region
    %19 = vst [vmem:[#allocation2] sm:$0xff] 0.0
    %20 = vst [vmem:[#allocation2 + $0x8] sm:$0xff] 0.0
    %21 = vst [vmem:[#allocation2 + $0x10] sm:$0xff] 0.0
    %22 = vst [vmem:[#allocation2 + $0x18] sm:$0xff] 0.0
    %23 = vst [vmem:[#allocation2 + $0x20] sm:$0xff] 0.0
    %24 = vst [vmem:[#allocation2 + $0x28] sm:$0xff] 0.0
    %25 = vst [vmem:[#allocation2 + $0x30] sm:$0xff] 0.0
    %26 = vst [vmem:[#allocation2 + $0x38] sm:$0xff] 0.0
    %27 = vst [vmem:[#allocation2 + $0x40] sm:$0xff] 0.0
    %28 = vst [vmem:[#allocation2 + $0x48] sm:$0xff] 0.0
    %29 = vst [vmem:[#allocation2 + $0x50] sm:$0xff] 0.0
    %30 = vst [vmem:[#allocation2 + $0x58] sm:$0xff] 0.0
    %31 = vst [vmem:[#allocation2 + $0x60] sm:$0xff] 0.0
    %32 = vst [vmem:[#allocation2 + $0x68] sm:$0xff] 0.0
    %33 = vst [vmem:[#allocation2 + $0x70] sm:$0xff] 0.0
    %34 = vst [vmem:[#allocation2 + $0x78] sm:$0xff] 0.0
  $region17: #{basic_block_forward.4} parent=0 // pred_fallthru
    _
  %v35 = vld [vmem:[#allocation2] sm:$0xff]
  %v36 = vld [vmem:[#allocation2 + $0x8] sm:$0xff]
  %v37 = vld [vmem:[#allocation2 + $0x10] sm:$0xff]
  %v38 = vld [vmem:[#allocation2 + $0x18] sm:$0xff]
  %v39 = vld [vmem:[#allocation2 + $0x20] sm:$0xff]
  %v40 = vld [vmem:[#allocation2 + $0x28] sm:$0xff]
  %v41 = vld [vmem:[#allocation2 + $0x30] sm:$0xff]
  %v42 = vld [vmem:[#allocation2 + $0x38] sm:$0xff]
  %v43 = vld [vmem:[#allocation2 + $0x40] sm:$0xff]
  %v44 = vld [vmem:[#allocation2 + $0x48] sm:$0xff]
  %v45 = vld [vmem:[#allocation2 + $0x50] sm:$0xff]
  %v46 = vld [vmem:[#allocation2 + $0x58] sm:$0xff]
  %v47 = vld [vmem:[#allocation2 + $0x60] sm:$0xff]
  %v48 = vld [vmem:[#allocation2 + $0x68] sm:$0xff]
  %v49 = vld [vmem:[#allocation2 + $0x70] sm:$0xff]
  %v50 = vld [vmem:[#allocation2 + $0x78] sm:$0xff]
  %v51 = vld [vmem:[%s0] sm:$0xf]
  %v52 = vld [vmem:[%s0 + $0x4] sm:$0xf]
  %v53 = vld [vmem:[%s0 + $0x8] sm:$0xf]
  %v54 = vld [vmem:[%s0 + $0xc] sm:$0xf]
  %v55 = vld [vmem:[%s0 + $0x10] sm:$0xf]
  %v56 = vld [vmem:[%s0 + $0x14] sm:$0xf]
  %v57 = vld [vmem:[%s0 + $0x18] sm:$0xf]
  %v58 = vld [vmem:[%s0 + $0x1c] sm:$0xf]
  %v59 = vld [vmem:[%s0 + $0x20] sm:$0xf]
  %v60 = vld [vmem:[%s0 + $0x24] sm:$0xf]
  %v61 = vld [vmem:[%s0 + $0x28] sm:$0xf]
  %v62 = vld [vmem:[%s0 + $0x2c] sm:$0xf]
  %v63 = vld [vmem:[%s0 + $0x30] sm:$0xf]
  %v64 = vld [vmem:[%s0 + $0x34] sm:$0xf]
  %v65 = vld [vmem:[%s0 + $0x38] sm:$0xf]
  %v66 = vld [vmem:[%s0 + $0x3c] sm:$0xf]
  %v67 = vld [vmem:[%s1] sm:$0xf]
  %v68 = vld [vmem:[%s1 + $0x4] sm:$0xf]
  %v69 = vld [vmem:[%s1 + $0x8] sm:$0xf]
  %v70 = vld [vmem:[%s1 + $0xc] sm:$0xf]
  %v71 = vld [vmem:[%s1 + $0x10] sm:$0xf]
  %v72 = vld [vmem:[%s1 + $0x14] sm:$0xf]
  %v73 = vld [vmem:[%s1 + $0x18] sm:$0xf]
  %v74 = vld [vmem:[%s1 + $0x1c] sm:$0xf]
  %v75 = vld [vmem:[%s1 + $0x20] sm:$0xf]
  %v76 = vld [vmem:[%s1 + $0x24] sm:$0xf]
  %v77 = vld [vmem:[%s1 + $0x28] sm:$0xf]
  %v78 = vld [vmem:[%s1 + $0x2c] sm:$0xf]
  %v79 = vld [vmem:[%s1 + $0x30] sm:$0xf]
  %v80 = vld [vmem:[%s1 + $0x34] sm:$0xf]
  %v81 = vld [vmem:[%s1 + $0x38] sm:$0xf]
  %v82 = vld [vmem:[%s1 + $0x3c] sm:$0xf]
  %v99 = vunpack.c.l.b16 %v51
  %v100 = vunpack.c.l.b16 %v52
  %v101 = vunpack.c.l.b16 %v53
  %v102 = vunpack.c.l.b16 %v54
  %v103 = vunpack.c.l.b16 %v55
  %v104 = vunpack.c.l.b16 %v56
  %v105 = vunpack.c.l.b16 %v57
  %v106 = vunpack.c.l.b16 %v58
  %v107 = vunpack.c.l.b16 %v59
  %v108 = vunpack.c.l.b16 %v60
  %v109 = vunpack.c.l.b16 %v61
  %v110 = vunpack.c.l.b16 %v62
  %v111 = vunpack.c.l.b16 %v63
  %v112 = vunpack.c.l.b16 %v64
  %v113 = vunpack.c.l.b16 %v65
  %v114 = vunpack.c.l.b16 %v66
  %v115 = vpack.c.b16 %v100, %v99
  %v116 = vpack.c.b16 %v102, %v101
  %v117 = vpack.c.b16 %v104, %v103
  %v118 = vpack.c.b16 %v106, %v105
  %v119 = vpack.c.b16 %v108, %v107
  %v120 = vpack.c.b16 %v110, %v109
  %v121 = vpack.c.b16 %v112, %v111
  %v122 = vpack.c.b16 %v114, %v113
  %v147 = vunpack.c.l.b16 %v67
  %v148 = vunpack.c.l.b16 %v68
  %v149 = vunpack.c.l.b16 %v69
  %v150 = vunpack.c.l.b16 %v70
  %v151 = vunpack.c.l.b16 %v71
  %v152 = vunpack.c.l.b16 %v72
  %v153 = vunpack.c.l.b16 %v73
  %v154 = vunpack.c.l.b16 %v74
  %v155 = vunpack.c.l.b16 %v75
  %v156 = vunpack.c.l.b16 %v76
  %v157 = vunpack.c.l.b16 %v77
  %v158 = vunpack.c.l.b16 %v78
  %v159 = vunpack.c.l.b16 %v79
  %v160 = vunpack.c.l.b16 %v80
  %v161 = vunpack.c.l.b16 %v81
  %v162 = vunpack.c.l.b16 %v82
  %v163 = vpack.c.b16 %v148, %v147
  %v164 = vpack.c.b16 %v150, %v149
  %v165 = vpack.c.b16 %v152, %v151
  %v166 = vpack.c.b16 %v154, %v153
  %v167 = vpack.c.b16 %v156, %v155
  %v168 = vpack.c.b16 %v158, %v157
  %v169 = vpack.c.b16 %v160, %v159
  %v170 = vpack.c.b16 %v162, %v161
  %179 = vmatprep.subr.bf16.mxu0 0
  %180 = vmatpush1.bf16.msra.mxu0 %v170
  %181 = vmatprep.subr.bf16.mxu0 0
  %182 = vmatpush1.bf16.msra.mxu0 %v169
  %183 = vmatprep.subr.bf16.mxu0 0
  %184 = vmatpush1.bf16.msra.mxu0 %v168
  %185 = vmatprep.subr.bf16.mxu0 0
  %186 = vmatpush1.bf16.msra.mxu0 %v167
  %187 = vmatprep.subr.bf16.mxu0 0
  %188 = vmatpush1.bf16.msra.mxu0 %v166
  %189 = vmatprep.subr.bf16.mxu0 0
  %190 = vmatpush1.bf16.msra.mxu0 %v165
  %191 = vmatprep.subr.bf16.mxu0 0
  %192 = vmatpush1.bf16.msra.mxu0 %v164
  %193 = vmatprep.subr.bf16.mxu0 0
  %194 = vmatpush1.bf16.msra.mxu0 %v163
  %195 = vmatprep.subr.bf16.mxu0 0
  %196 = vmatpush2.bf16.msra.mxu0 0
  %197 = vmatprep.subr.bf16.mxu0 0
  %198 = vmatpush2.bf16.msra.mxu0 0
  %199 = vmatprep.subr.bf16.mxu0 0
  %200 = vmatpush2.bf16.msra.mxu0 0
  %201 = vmatprep.subr.bf16.mxu0 0
  %202 = vmatpush2.bf16.msra.mxu0 0
  %203 = vmatprep.subr.bf16.mxu0 0
  %204 = vmatpush2.bf16.msra.mxu0 0
  %205 = vmatprep.subr.bf16.mxu0 0
  %206 = vmatpush2.bf16.msra.mxu0 0
  %207 = vmatprep.subr.bf16.mxu0 0
  %208 = vmatpush2.bf16.msra.mxu0 0
  %209 = vmatprep.subr.bf16.mxu0 0
  %210 = vmatpush2.bf16.msra.mxu0 0
  %211 = vmatprep.mubr.bf16.mxu0 0
  %212 = vmatmul.mubr.bf16.gmra.mxu0 %v115
  %v213 = vpop.f32.mrf.mxu0
  %v214 = vadd.f32 0.0, %v213
  %v215 = vpop.f32.mrf.mxu0
  %v216 = vpop.f32.mrf.mxu0
  %v217 = vadd.f32 0.0, %v216
  %v218 = vpop.f32.mrf.mxu0
  %219 = vmatprep.mubr.bf16.mxu0 0
  %220 = vmatmul.mubr.bf16.gmra.mxu0 %v116
  %v221 = vpop.f32.mrf.mxu0
  %v222 = vadd.f32 0.0, %v221
  %v223 = vpop.f32.mrf.mxu0
  %v224 = vpop.f32.mrf.mxu0
  %v225 = vadd.f32 0.0, %v224
  %v226 = vpop.f32.mrf.mxu0
  %227 = vmatprep.mubr.bf16.mxu0 0
  %228 = vmatmul.mubr.bf16.gmra.mxu0 %v117
  %v229 = vpop.f32.mrf.mxu0
  %v230 = vadd.f32 0.0, %v229
  %v231 = vpop.f32.mrf.mxu0
  %v232 = vpop.f32.mrf.mxu0
  %v233 = vadd.f32 0.0, %v232
  %v234 = vpop.f32.mrf.mxu0
  %235 = vmatprep.mubr.bf16.mxu0 0
  %236 = vmatmul.mubr.bf16.gmra.mxu0 %v118
  %v237 = vpop.f32.mrf.mxu0
  %v238 = vadd.f32 0.0, %v237
  %v239 = vpop.f32.mrf.mxu0
  %v240 = vpop.f32.mrf.mxu0
  %v241 = vadd.f32 0.0, %v240
  %v242 = vpop.f32.mrf.mxu0
  %243 = vmatprep.mubr.bf16.mxu0 0
  %244 = vmatmul.mubr.bf16.gmra.mxu0 %v119
  %v245 = vpop.f32.mrf.mxu0
  %v246 = vadd.f32 0.0, %v245
  %v247 = vpop.f32.mrf.mxu0
  %v248 = vpop.f32.mrf.mxu0
  %v249 = vadd.f32 0.0, %v248
  %v250 = vpop.f32.mrf.mxu0
  %251 = vmatprep.mubr.bf16.mxu0 0
  %252 = vmatmul.mubr.bf16.gmra.mxu0 %v120
  %v253 = vpop.f32.mrf.mxu0
  %v254 = vadd.f32 0.0, %v253
  %v255 = vpop.f32.mrf.mxu0
  %v256 = vpop.f32.mrf.mxu0
  %v257 = vadd.f32 0.0, %v256
  %v258 = vpop.f32.mrf.mxu0
  %259 = vmatprep.mubr.bf16.mxu0 0
  %260 = vmatmul.mubr.bf16.gmra.mxu0 %v121
  %v261 = vpop.f32.mrf.mxu0
  %v262 = vadd.f32 0.0, %v261
  %v263 = vpop.f32.mrf.mxu0
  %v264 = vpop.f32.mrf.mxu0
  %v265 = vadd.f32 0.0, %v264
  %v266 = vpop.f32.mrf.mxu0
  %267 = vmatprep.mubr.bf16.mxu0 0
  %268 = vmatmul.mubr.bf16.gmra.mxu0 %v122
  %v269 = vpop.f32.mrf.mxu0
  %v270 = vadd.f32 0.0, %v269
  %v271 = vpop.f32.mrf.mxu0
  %v272 = vpop.f32.mrf.mxu0
  %v273 = vadd.f32 0.0, %v272
  %v274 = vpop.f32.mrf.mxu0
  %275 = vdwg.mxu0
  %v276 = vadd.f32 %v35, %v214
  %v277 = vadd.f32 %v36, %v217
  %v278 = vadd.f32 %v37, %v222
  %v279 = vadd.f32 %v38, %v225
  %v280 = vadd.f32 %v39, %v230
  %v281 = vadd.f32 %v40, %v233
  %v282 = vadd.f32 %v41, %v238
  %v283 = vadd.f32 %v42, %v241
  %v284 = vadd.f32 %v43, %v246
  %v285 = vadd.f32 %v44, %v249
  %v286 = vadd.f32 %v45, %v254
  %v287 = vadd.f32 %v46, %v257
  %v288 = vadd.f32 %v47, %v262
  %v289 = vadd.f32 %v48, %v265
  %v290 = vadd.f32 %v49, %v270
  %v291 = vadd.f32 %v50, %v273
  %292 = vst [vmem:[#allocation2] sm:$0xff] %v276
  %293 = vst [vmem:[#allocation2 + $0x8] sm:$0xff] %v277
  %294 = vst [vmem:[#allocation2 + $0x10] sm:$0xff] %v278
  %295 = vst [vmem:[#allocation2 + $0x18] sm:$0xff] %v279
  %296 = vst [vmem:[#allocation2 + $0x20] sm:$0xff] %v280
  %297 = vst [vmem:[#allocation2 + $0x28] sm:$0xff] %v281
  %298 = vst [vmem:[#allocation2 + $0x30] sm:$0xff] %v282
  %299 = vst [vmem:[#allocation2 + $0x38] sm:$0xff] %v283
  %300 = vst [vmem:[#allocation2 + $0x40] sm:$0xff] %v284
  %301 = vst [vmem:[#allocation2 + $0x48] sm:$0xff] %v285
  %302 = vst [vmem:[#allocation2 + $0x50] sm:$0xff] %v286
  %303 = vst [vmem:[#allocation2 + $0x58] sm:$0xff] %v287
  %304 = vst [vmem:[#allocation2 + $0x60] sm:$0xff] %v288
  %305 = vst [vmem:[#allocation2 + $0x68] sm:$0xff] %v289
  %306 = vst [vmem:[#allocation2 + $0x70] sm:$0xff] %v290
  %307 = vst [vmem:[#allocation2 + $0x78] sm:$0xff] %v291
  // Predicated region
  $region18: #{basic_block_forward.4} parent=0 // pred_check
    %p308 = pneg %p15
  $region19: #{basic_block_forward.4} parent=0 // pred_check_branch
    %310 = sbr.rel (%p308) target = $region21
  $region20: #{basic_block_forward.4} parent=0 // pred_region
    %v311 = vld [vmem:[#allocation2] sm:$0xff]
    %v312 = vld [vmem:[#allocation2 + $0x8] sm:$0xff]
    %v313 = vld [vmem:[#allocation2 + $0x10] sm:$0xff]
    %v314 = vld [vmem:[#allocation2 + $0x18] sm:$0xff]
    %v315 = vld [vmem:[#allocation2 + $0x20] sm:$0xff]
    %v316 = vld [vmem:[#allocation2 + $0x28] sm:$0xff]
    %v317 = vld [vmem:[#allocation2 + $0x30] sm:$0xff]
    %v318 = vld [vmem:[#allocation2 + $0x38] sm:$0xff]
    %v319 = vld [vmem:[#allocation2 + $0x40] sm:$0xff]
    %v320 = vld [vmem:[#allocation2 + $0x48] sm:$0xff]
    %v321 = vld [vmem:[#allocation2 + $0x50] sm:$0xff]
    %v322 = vld [vmem:[#allocation2 + $0x58] sm:$0xff]
    %v323 = vld [vmem:[#allocation2 + $0x60] sm:$0xff]
    %v324 = vld [vmem:[#allocation2 + $0x68] sm:$0xff]
    %v325 = vld [vmem:[#allocation2 + $0x70] sm:$0xff]
    %v326 = vld [vmem:[#allocation2 + $0x78] sm:$0xff]
    %v327 = vld [vmem:[%s2] sm:$0x1]
    %v329 = vlaneseq
    %v330 = vshrl.u32 %v329, 7
    %v331 = vsub.s32 0, %v330
    %v332 = vrot.slane %v327, %v331
    %v334 = vadd.f32 %v311, %v332
    %v335 = vadd.f32 %v312, %v332
    %v336 = vadd.f32 %v313, %v332
    %v337 = vadd.f32 %v314, %v332
    %v338 = vadd.f32 %v315, %v332
    %v339 = vadd.f32 %v316, %v332
    %v340 = vadd.f32 %v317, %v332
    %v341 = vadd.f32 %v318, %v332
    %v342 = vadd.f32 %v319, %v332
    %v343 = vadd.f32 %v320, %v332
    %v344 = vadd.f32 %v321, %v332
    %v345 = vadd.f32 %v322, %v332
    %v346 = vadd.f32 %v323, %v332
    %v347 = vadd.f32 %v324, %v332
    %v348 = vadd.f32 %v325, %v332
    %v349 = vadd.f32 %v326, %v332
    %350 = vst [vmem:[%s3] sm:$0xff] %v334
    %351 = vst [vmem:[%s3 + $0x8] sm:$0xff] %v335
    %352 = vst [vmem:[%s3 + $0x10] sm:$0xff] %v336
    %353 = vst [vmem:[%s3 + $0x18] sm:$0xff] %v337
    %354 = vst [vmem:[%s3 + $0x20] sm:$0xff] %v338
    %355 = vst [vmem:[%s3 + $0x28] sm:$0xff] %v339
    %356 = vst [vmem:[%s3 + $0x30] sm:$0xff] %v340
    %357 = vst [vmem:[%s3 + $0x38] sm:$0xff] %v341
    %358 = vst [vmem:[%s3 + $0x40] sm:$0xff] %v342
    %359 = vst [vmem:[%s3 + $0x48] sm:$0xff] %v343
    %360 = vst [vmem:[%s3 + $0x50] sm:$0xff] %v344
    %361 = vst [vmem:[%s3 + $0x58] sm:$0xff] %v345
    %362 = vst [vmem:[%s3 + $0x60] sm:$0xff] %v346
    %363 = vst [vmem:[%s3 + $0x68] sm:$0xff] %v347
    %364 = vst [vmem:[%s3 + $0x70] sm:$0xff] %v348
    %365 = vst [vmem:[%s3 + $0x78] sm:$0xff] %v349
  $region21: #{basic_block_forward.4} parent=0 // pred_fallthru
    _
  // Predicated region
  $region22: #{basic_block_forward.4} parent=0 // pred_check
    _
  $region23: #{basic_block_forward.4} parent=0 // pred_check_branch
    %367 = sbr.rel (0) target = $region25
  $region24: #{basic_block_forward.4} parent=0 // pred_region
    _
  $region25: #{basic_block_forward.4} parent=0 // pred_fallthru
    _
  // Predicated region
  $region26: #{basic_block_forward.4} parent=0 // pred_check
    _
  $region27: #{basic_block_forward.4} parent=0 // pred_check_branch
    %369 = sbr.rel (0) target = $region29
  $region28: #{basic_block_forward.4} parent=0 // pred_region
    _
  $region29: #{basic_block_forward.4} parent=0 // pred_fallthru
    _

// kernel: basic_block_forward.5
$region0: #{basic_block_forward.5}
  #allocation0 [shape = 'u32[]', space=smem, size = 0x4, offset = 0x4, fixed_abs, tag = 'smem constant byte address 0x4 - core index']
  #allocation1 [shape = 'u32[144,128]{1,0:T(1,128)}', space=vmem, size = 0x12000, scoped, tag = 'internal scratch']
  #allocation2 [shape = 'f32[128,128]{1,0:T(8,128)}', space=vmem, size = 0x10000, scoped, tag = 'scratch operand']
  %s0 = inlined_call_operand.vmem [shape: bf16[128,128], index: 0, kind: input, shape index: {}]
  %s1 = inlined_call_operand.vmem [shape: bf16[128,128], index: 1, kind: input, shape index: {}]
  %s2 = inlined_call_operand.vmem [shape: f32[1,128], index: 2, kind: input, shape index: {}]
  %s3 = inlined_call_operand.vmem [shape: f32[128,128], index: 3, kind: input, shape index: {}, may-alias: {3,4}]
  %s4 = inlined_call_operand.vmem [shape: f32[128,128], index: 4, kind: output, shape index: {}, may-alias: {3,4}]
  %s5 = sld [smem:[#allocation0]]
  $region34: #{basic_block_forward.5} parent=0
    _
  %s7 = ssub.s32 1, %s5
  %s8 = scalar_select 0, %s7, %s5
  // Predicated region
  $region2: #{basic_block_forward.5} parent=0 // pred_check
    _
  $region3: #{basic_block_forward.5} parent=0 // pred_check_branch
    %10 = sbr.rel (0) target = $region5
  $region4: #{basic_block_forward.5} parent=0 // pred_region
    _
  $region5: #{basic_block_forward.5} parent=0 // pred_fallthru
    _
  // Predicated region
  $region6: #{basic_block_forward.5} parent=0 // pred_check
    _
  $region7: #{basic_block_forward.5} parent=0 // pred_check_branch
    %12 = sbr.rel (0) target = $region9
  $region8: #{basic_block_forward.5} parent=0 // pred_region
    _
  $region9: #{basic_block_forward.5} parent=0 // pred_fallthru
    _
  // Predicated region
  $region10: #{basic_block_forward.5} parent=0 // pred_check
    _
  $region11: #{basic_block_forward.5} parent=0 // pred_check_branch
    %14 = sbr.rel (0) target = $region13
  $region12: #{basic_block_forward.5} parent=0 // pred_region
    _
  $region13: #{basic_block_forward.5} parent=0 // pred_fallthru
    _
  // Predicated region
  $region14: #{basic_block_forward.5} parent=0 // pred_check
    _
  $region15: #{basic_block_forward.5} parent=0 // pred_check_branch
    %16 = sbr.rel (0) target = $region17
  $region16: #{basic_block_forward.5} parent=0 // pred_region
    _
  $region17: #{basic_block_forward.5} parent=0 // pred_fallthru
    _
  %p18 = scmp.eq.s32.totalorder 0, 0
  // Predicated region
  $region18: #{basic_block_forward.5} parent=0 // pred_check
    %p19 = pneg %p18
  $region19: #{basic_block_forward.5} parent=0 // pred_check_branch
    %21 = sbr.rel (%p19) target = $region21
  $region20: #{basic_block_forward.5} parent=0 // pred_region
    %22 = vst [vmem:[#allocation2] sm:$0xff] 0.0
    %23 = vst [vmem:[#allocation2 + $0x8] sm:$0xff] 0.0
    %24 = vst [vmem:[#allocation2 + $0x10] sm:$0xff] 0.0
    %25 = vst [vmem:[#allocation2 + $0x18] sm:$0xff] 0.0
    %26 = vst [vmem:[#allocation2 + $0x20] sm:$0xff] 0.0
    %27 = vst [vmem:[#allocation2 + $0x28] sm:$0xff] 0.0
    %28 = vst [vmem:[#allocation2 + $0x30] sm:$0xff] 0.0
    %29 = vst [vmem:[#allocation2 + $0x38] sm:$0xff] 0.0
    %30 = vst [vmem:[#allocation2 + $0x40] sm:$0xff] 0.0
    %31 = vst [vmem:[#allocation2 + $0x48] sm:$0xff] 0.0
    %32 = vst [vmem:[#allocation2 + $0x50] sm:$0xff] 0.0
    %33 = vst [vmem:[#allocation2 + $0x58] sm:$0xff] 0.0
    %34 = vst [vmem:[#allocation2 + $0x60] sm:$0xff] 0.0
    %35 = vst [vmem:[#allocation2 + $0x68] sm:$0xff] 0.0
    %36 = vst [vmem:[#allocation2 + $0x70] sm:$0xff] 0.0
    %37 = vst [vmem:[#allocation2 + $0x78] sm:$0xff] 0.0
  $region21: #{basic_block_forward.5} parent=0 // pred_fallthru
    _
  %v38 = vld [vmem:[#allocation2] sm:$0xff]
  %v39 = vld [vmem:[#allocation2 + $0x8] sm:$0xff]
  %v40 = vld [vmem:[#allocation2 + $0x10] sm:$0xff]
  %v41 = vld [vmem:[#allocation2 + $0x18] sm:$0xff]
  %v42 = vld [vmem:[#allocation2 + $0x20] sm:$0xff]
  %v43 = vld [vmem:[#allocation2 + $0x28] sm:$0xff]
  %v44 = vld [vmem:[#allocation2 + $0x30] sm:$0xff]
  %v45 = vld [vmem:[#allocation2 + $0x38] sm:$0xff]
  %v46 = vld [vmem:[#allocation2 + $0x40] sm:$0xff]
  %v47 = vld [vmem:[#allocation2 + $0x48] sm:$0xff]
  %v48 = vld [vmem:[#allocation2 + $0x50] sm:$0xff]
  %v49 = vld [vmem:[#allocation2 + $0x58] sm:$0xff]
  %v50 = vld [vmem:[#allocation2 + $0x60] sm:$0xff]
  %v51 = vld [vmem:[#allocation2 + $0x68] sm:$0xff]
  %v52 = vld [vmem:[#allocation2 + $0x70] sm:$0xff]
  %v53 = vld [vmem:[#allocation2 + $0x78] sm:$0xff]
  %v54 = vld [vmem:[%s0] sm:$0xf]
  %v55 = vld [vmem:[%s0 + $0x4] sm:$0xf]
  %v56 = vld [vmem:[%s0 + $0x8] sm:$0xf]
  %v57 = vld [vmem:[%s0 + $0xc] sm:$0xf]
  %v58 = vld [vmem:[%s0 + $0x10] sm:$0xf]
  %v59 = vld [vmem:[%s0 + $0x14] sm:$0xf]
  %v60 = vld [vmem:[%s0 + $0x18] sm:$0xf]
  %v61 = vld [vmem:[%s0 + $0x1c] sm:$0xf]
  %v62 = vld [vmem:[%s0 + $0x20] sm:$0xf]
  %v63 = vld [vmem:[%s0 + $0x24] sm:$0xf]
  %v64 = vld [vmem:[%s0 + $0x28] sm:$0xf]
  %v65 = vld [vmem:[%s0 + $0x2c] sm:$0xf]
  %v66 = vld [vmem:[%s0 + $0x30] sm:$0xf]
  %v67 = vld [vmem:[%s0 + $0x34] sm:$0xf]
  %v68 = vld [vmem:[%s0 + $0x38] sm:$0xf]
  %v69 = vld [vmem:[%s0 + $0x3c] sm:$0xf]
  %v70 = vld [vmem:[%s1] sm:$0xf]
  %v71 = vld [vmem:[%s1 + $0x4] sm:$0xf]
  %v72 = vld [vmem:[%s1 + $0x8] sm:$0xf]
  %v73 = vld [vmem:[%s1 + $0xc] sm:$0xf]
  %v74 = vld [vmem:[%s1 + $0x10] sm:$0xf]
  %v75 = vld [vmem:[%s1 + $0x14] sm:$0xf]
  %v76 = vld [vmem:[%s1 + $0x18] sm:$0xf]
  %v77 = vld [vmem:[%s1 + $0x1c] sm:$0xf]
  %v78 = vld [vmem:[%s1 + $0x20] sm:$0xf]
  %v79 = vld [vmem:[%s1 + $0x24] sm:$0xf]
  %v80 = vld [vmem:[%s1 + $0x28] sm:$0xf]
  %v81 = vld [vmem:[%s1 + $0x2c] sm:$0xf]
  %v82 = vld [vmem:[%s1 + $0x30] sm:$0xf]
  %v83 = vld [vmem:[%s1 + $0x34] sm:$0xf]
  %v84 = vld [vmem:[%s1 + $0x38] sm:$0xf]
  %v85 = vld [vmem:[%s1 + $0x3c] sm:$0xf]
  %v102 = vunpack.c.l.b16 %v54
  %v103 = vunpack.c.l.b16 %v55
  %v104 = vunpack.c.l.b16 %v56
  %v105 = vunpack.c.l.b16 %v57
  %v106 = vunpack.c.l.b16 %v58
  %v107 = vunpack.c.l.b16 %v59
  %v108 = vunpack.c.l.b16 %v60
  %v109 = vunpack.c.l.b16 %v61
  %v110 = vunpack.c.l.b16 %v62
  %v111 = vunpack.c.l.b16 %v63
  %v112 = vunpack.c.l.b16 %v64
  %v113 = vunpack.c.l.b16 %v65
  %v114 = vunpack.c.l.b16 %v66
  %v115 = vunpack.c.l.b16 %v67
  %v116 = vunpack.c.l.b16 %v68
  %v117 = vunpack.c.l.b16 %v69
  %v118 = vpack.c.b16 %v103, %v102
  %v119 = vpack.c.b16 %v105, %v104
  %v120 = vpack.c.b16 %v107, %v106
  %v121 = vpack.c.b16 %v109, %v108
  %v122 = vpack.c.b16 %v111, %v110
  %v123 = vpack.c.b16 %v113, %v112
  %v124 = vpack.c.b16 %v115, %v114
  %v125 = vpack.c.b16 %v117, %v116
  %v150 = vunpack.c.l.b16 %v70
  %v151 = vunpack.c.l.b16 %v71
  %v152 = vunpack.c.l.b16 %v72
  %v153 = vunpack.c.l.b16 %v73
  %v154 = vunpack.c.l.b16 %v74
  %v155 = vunpack.c.l.b16 %v75
  %v156 = vunpack.c.l.b16 %v76
  %v157 = vunpack.c.l.b16 %v77
  %v158 = vunpack.c.l.b16 %v78
  %v159 = vunpack.c.l.b16 %v79
  %v160 = vunpack.c.l.b16 %v80
  %v161 = vunpack.c.l.b16 %v81
  %v162 = vunpack.c.l.b16 %v82
  %v163 = vunpack.c.l.b16 %v83
  %v164 = vunpack.c.l.b16 %v84
  %v165 = vunpack.c.l.b16 %v85
  %v166 = vpack.c.b16 %v151, %v150
  %v167 = vpack.c.b16 %v153, %v152
  %v168 = vpack.c.b16 %v155, %v154
  %v169 = vpack.c.b16 %v157, %v156
  %v170 = vpack.c.b16 %v159, %v158
  %v171 = vpack.c.b16 %v161, %v160
  %v172 = vpack.c.b16 %v163, %v162
  %v173 = vpack.c.b16 %v165, %v164
  %182 = vmatprep.subr.bf16.mxu0 0
  %183 = vmatpush1.bf16.msra.mxu0 %v173
  %184 = vmatprep.subr.bf16.mxu0 0
  %185 = vmatpush1.bf16.msra.mxu0 %v172
  %186 = vmatprep.subr.bf16.mxu0 0
  %187 = vmatpush1.bf16.msra.mxu0 %v171
  %188 = vmatprep.subr.bf16.mxu0 0
  %189 = vmatpush1.bf16.msra.mxu0 %v170
  %190 = vmatprep.subr.bf16.mxu0 0
  %191 = vmatpush1.bf16.msra.mxu0 %v169
  %192 = vmatprep.subr.bf16.mxu0 0
  %193 = vmatpush1.bf16.msra.mxu0 %v168
  %194 = vmatprep.subr.bf16.mxu0 0
  %195 = vmatpush1.bf16.msra.mxu0 %v167
  %196 = vmatprep.subr.bf16.mxu0 0
  %197 = vmatpush1.bf16.msra.mxu0 %v166
  %198 = vmatprep.subr.bf16.mxu0 0
  %199 = vmatpush2.bf16.msra.mxu0 0
  %200 = vmatprep.subr.bf16.mxu0 0
  %201 = vmatpush2.bf16.msra.mxu0 0
  %202 = vmatprep.subr.bf16.mxu0 0
  %203 = vmatpush2.bf16.msra.mxu0 0
  %204 = vmatprep.subr.bf16.mxu0 0
  %205 = vmatpush2.bf16.msra.mxu0 0
  %206 = vmatprep.subr.bf16.mxu0 0
  %207 = vmatpush2.bf16.msra.mxu0 0
  %208 = vmatprep.subr.bf16.mxu0 0
  %209 = vmatpush2.bf16.msra.mxu0 0
  %210 = vmatprep.subr.bf16.mxu0 0
  %211 = vmatpush2.bf16.msra.mxu0 0
  %212 = vmatprep.subr.bf16.mxu0 0
  %213 = vmatpush2.bf16.msra.mxu0 0
  %214 = vmatprep.mubr.bf16.mxu0 0
  %215 = vmatmul.mubr.bf16.gmra.mxu0 %v118
  %v216 = vpop.f32.mrf.mxu0
  %v217 = vadd.f32 0.0, %v216
  %v218 = vpop.f32.mrf.mxu0
  %v219 = vpop.f32.mrf.mxu0
  %v220 = vadd.f32 0.0, %v219
  %v221 = vpop.f32.mrf.mxu0
  %222 = vmatprep.mubr.bf16.mxu0 0
  %223 = vmatmul.mubr.bf16.gmra.mxu0 %v119
  %v224 = vpop.f32.mrf.mxu0
  %v225 = vadd.f32 0.0, %v224
  %v226 = vpop.f32.mrf.mxu0
  %v227 = vpop.f32.mrf.mxu0
  %v228 = vadd.f32 0.0, %v227
  %v229 = vpop.f32.mrf.mxu0
  %230 = vmatprep.mubr.bf16.mxu0 0
  %231 = vmatmul.mubr.bf16.gmra.mxu0 %v120
  %v232 = vpop.f32.mrf.mxu0
  %v233 = vadd.f32 0.0, %v232
  %v234 = vpop.f32.mrf.mxu0
  %v235 = vpop.f32.mrf.mxu0
  %v236 = vadd.f32 0.0, %v235
  %v237 = vpop.f32.mrf.mxu0
  %238 = vmatprep.mubr.bf16.mxu0 0
  %239 = vmatmul.mubr.bf16.gmra.mxu0 %v121
  %v240 = vpop.f32.mrf.mxu0
  %v241 = vadd.f32 0.0, %v240
  %v242 = vpop.f32.mrf.mxu0
  %v243 = vpop.f32.mrf.mxu0
  %v244 = vadd.f32 0.0, %v243
  %v245 = vpop.f32.mrf.mxu0
  %246 = vmatprep.mubr.bf16.mxu0 0
  %247 = vmatmul.mubr.bf16.gmra.mxu0 %v122
  %v248 = vpop.f32.mrf.mxu0
  %v249 = vadd.f32 0.0, %v248
  %v250 = vpop.f32.mrf.mxu0
  %v251 = vpop.f32.mrf.mxu0
  %v252 = vadd.f32 0.0, %v251
  %v253 = vpop.f32.mrf.mxu0
  %254 = vmatprep.mubr.bf16.mxu0 0
  %255 = vmatmul.mubr.bf16.gmra.mxu0 %v123
  %v256 = vpop.f32.mrf.mxu0
  %v257 = vadd.f32 0.0, %v256
  %v258 = vpop.f32.mrf.mxu0
  %v259 = vpop.f32.mrf.mxu0
  %v260 = vadd.f32 0.0, %v259
  %v261 = vpop.f32.mrf.mxu0
  %262 = vmatprep.mubr.bf16.mxu0 0
  %263 = vmatmul.mubr.bf16.gmra.mxu0 %v124
  %v264 = vpop.f32.mrf.mxu0
  %v265 = vadd.f32 0.0, %v264
  %v266 = vpop.f32.mrf.mxu0
  %v267 = vpop.f32.mrf.mxu0
  %v268 = vadd.f32 0.0, %v267
  %v269 = vpop.f32.mrf.mxu0
  %270 = vmatprep.mubr.bf16.mxu0 0
  %271 = vmatmul.mubr.bf16.gmra.mxu0 %v125
  %v272 = vpop.f32.mrf.mxu0
  %v273 = vadd.f32 0.0, %v272
  %v274 = vpop.f32.mrf.mxu0
  %v275 = vpop.f32.mrf.mxu0
  %v276 = vadd.f32 0.0, %v275
  %v277 = vpop.f32.mrf.mxu0
  %278 = vdwg.mxu0
  %v279 = vadd.f32 %v38, %v217
  %v280 = vadd.f32 %v39, %v220
  %v281 = vadd.f32 %v40, %v225
  %v282 = vadd.f32 %v41, %v228
  %v283 = vadd.f32 %v42, %v233
  %v284 = vadd.f32 %v43, %v236
  %v285 = vadd.f32 %v44, %v241
  %v286 = vadd.f32 %v45, %v244
  %v287 = vadd.f32 %v46, %v249
  %v288 = vadd.f32 %v47, %v252
  %v289 = vadd.f32 %v48, %v257
  %v290 = vadd.f32 %v49, %v260
  %v291 = vadd.f32 %v50, %v265
  %v292 = vadd.f32 %v51, %v268
  %v293 = vadd.f32 %v52, %v273
  %v294 = vadd.f32 %v53, %v276
  %295 = vst [vmem:[#allocation2] sm:$0xff] %v279
  %296 = vst [vmem:[#allocation2 + $0x8] sm:$0xff] %v280
  %297 = vst [vmem:[#allocation2 + $0x10] sm:$0xff] %v281
  %298 = vst [vmem:[#allocation2 + $0x18] sm:$0xff] %v282
  %299 = vst [vmem:[#allocation2 + $0x20] sm:$0xff] %v283
  %300 = vst [vmem:[#allocation2 + $0x28] sm:$0xff] %v284
  %301 = vst [vmem:[#allocation2 + $0x30] sm:$0xff] %v285
  %302 = vst [vmem:[#allocation2 + $0x38] sm:$0xff] %v286
  %303 = vst [vmem:[#allocation2 + $0x40] sm:$0xff] %v287
  %304 = vst [vmem:[#allocation2 + $0x48] sm:$0xff] %v288
  %305 = vst [vmem:[#allocation2 + $0x50] sm:$0xff] %v289
  %306 = vst [vmem:[#allocation2 + $0x58] sm:$0xff] %v290
  %307 = vst [vmem:[#allocation2 + $0x60] sm:$0xff] %v291
  %308 = vst [vmem:[#allocation2 + $0x68] sm:$0xff] %v292
  %309 = vst [vmem:[#allocation2 + $0x70] sm:$0xff] %v293
  %310 = vst [vmem:[#allocation2 + $0x78] sm:$0xff] %v294
  // Predicated region
  $region22: #{basic_block_forward.5} parent=0 // pred_check
    %p311 = pneg %p18
  $region23: #{basic_block_forward.5} parent=0 // pred_check_branch
    %313 = sbr.rel (%p311) target = $region25
  $region24: #{basic_block_forward.5} parent=0 // pred_region
    %v314 = vld [vmem:[#allocation2] sm:$0xff]
    %v315 = vld [vmem:[#allocation2 + $0x8] sm:$0xff]
    %v316 = vld [vmem:[#allocation2 + $0x10] sm:$0xff]
    %v317 = vld [vmem:[#allocation2 + $0x18] sm:$0xff]
    %v318 = vld [vmem:[#allocation2 + $0x20] sm:$0xff]
    %v319 = vld [vmem:[#allocation2 + $0x28] sm:$0xff]
    %v320 = vld [vmem:[#allocation2 + $0x30] sm:$0xff]
    %v321 = vld [vmem:[#allocation2 + $0x38] sm:$0xff]
    %v322 = vld [vmem:[#allocation2 + $0x40] sm:$0xff]
    %v323 = vld [vmem:[#allocation2 + $0x48] sm:$0xff]
    %v324 = vld [vmem:[#allocation2 + $0x50] sm:$0xff]
    %v325 = vld [vmem:[#allocation2 + $0x58] sm:$0xff]
    %v326 = vld [vmem:[#allocation2 + $0x60] sm:$0xff]
    %v327 = vld [vmem:[#allocation2 + $0x68] sm:$0xff]
    %v328 = vld [vmem:[#allocation2 + $0x70] sm:$0xff]
    %v329 = vld [vmem:[#allocation2 + $0x78] sm:$0xff]
    %v330 = vld [vmem:[%s2] sm:$0x1]
    %v332 = vlaneseq
    %v333 = vshrl.u32 %v332, 7
    %v334 = vsub.s32 0, %v333
    %v335 = vrot.slane %v330, %v334
    %v337 = vadd.f32 %v314, %v335
    %v338 = vadd.f32 %v315, %v335
    %v339 = vadd.f32 %v316, %v335
    %v340 = vadd.f32 %v317, %v335
    %v341 = vadd.f32 %v318, %v335
    %v342 = vadd.f32 %v319, %v335
    %v343 = vadd.f32 %v320, %v335
    %v344 = vadd.f32 %v321, %v335
    %v345 = vadd.f32 %v322, %v335
    %v346 = vadd.f32 %v323, %v335
    %v347 = vadd.f32 %v324, %v335
    %v348 = vadd.f32 %v325, %v335
    %v349 = vadd.f32 %v326, %v335
    %v350 = vadd.f32 %v327, %v335
    %v351 = vadd.f32 %v328, %v335
    %v352 = vadd.f32 %v329, %v335
    %v353 = vld [vmem:[%s3] sm:$0xff]
    %v354 = vld [vmem:[%s3 + $0x8] sm:$0xff]
    %v355 = vld [vmem:[%s3 + $0x10] sm:$0xff]
    %v356 = vld [vmem:[%s3 + $0x18] sm:$0xff]
    %v357 = vld [vmem:[%s3 + $0x20] sm:$0xff]
    %v358 = vld [vmem:[%s3 + $0x28] sm:$0xff]
    %v359 = vld [vmem:[%s3 + $0x30] sm:$0xff]
    %v360 = vld [vmem:[%s3 + $0x38] sm:$0xff]
    %v361 = vld [vmem:[%s3 + $0x40] sm:$0xff]
    %v362 = vld [vmem:[%s3 + $0x48] sm:$0xff]
    %v363 = vld [vmem:[%s3 + $0x50] sm:$0xff]
    %v364 = vld [vmem:[%s3 + $0x58] sm:$0xff]
    %v365 = vld [vmem:[%s3 + $0x60] sm:$0xff]
    %v366 = vld [vmem:[%s3 + $0x68] sm:$0xff]
    %v367 = vld [vmem:[%s3 + $0x70] sm:$0xff]
    %v368 = vld [vmem:[%s3 + $0x78] sm:$0xff]
    %v369 = vadd.f32 %v337, %v353
    %v370 = vadd.f32 %v338, %v354
    %v371 = vadd.f32 %v339, %v355
    %v372 = vadd.f32 %v340, %v356
    %v373 = vadd.f32 %v341, %v357
    %v374 = vadd.f32 %v342, %v358
    %v375 = vadd.f32 %v343, %v359
    %v376 = vadd.f32 %v344, %v360
    %v377 = vadd.f32 %v345, %v361
    %v378 = vadd.f32 %v346, %v362
    %v379 = vadd.f32 %v347, %v363
    %v380 = vadd.f32 %v348, %v364
    %v381 = vadd.f32 %v349, %v365
    %v382 = vadd.f32 %v350, %v366
    %v383 = vadd.f32 %v351, %v367
    %v384 = vadd.f32 %v352, %v368
    %v385 = vmax.f32 %v369, 0.0
    %v386 = vmax.f32 %v370, 0.0
    %v387 = vmax.f32 %v371, 0.0
    %v388 = vmax.f32 %v372, 0.0
    %v389 = vmax.f32 %v373, 0.0
    %v390 = vmax.f32 %v374, 0.0
    %v391 = vmax.f32 %v375, 0.0
    %v392 = vmax.f32 %v376, 0.0
    %v393 = vmax.f32 %v377, 0.0
    %v394 = vmax.f32 %v378, 0.0
    %v395 = vmax.f32 %v379, 0.0
    %v396 = vmax.f32 %v380, 0.0
    %v397 = vmax.f32 %v381, 0.0
    %v398 = vmax.f32 %v382, 0.0
    %v399 = vmax.f32 %v383, 0.0
    %v400 = vmax.f32 %v384, 0.0
    %401 = vst [vmem:[%s4] sm:$0xff] %v385
    %402 = vst [vmem:[%s4 + $0x8] sm:$0xff] %v386
    %403 = vst [vmem:[%s4 + $0x10] sm:$0xff] %v387
    %404 = vst [vmem:[%s4 + $0x18] sm:$0xff] %v388
    %405 = vst [vmem:[%s4 + $0x20] sm:$0xff] %v389
    %406 = vst [vmem:[%s4 + $0x28] sm:$0xff] %v390
    %407 = vst [vmem:[%s4 + $0x30] sm:$0xff] %v391
    %408 = vst [vmem:[%s4 + $0x38] sm:$0xff] %v392
    %409 = vst [vmem:[%s4 + $0x40] sm:$0xff] %v393
    %410 = vst [vmem:[%s4 + $0x48] sm:$0xff] %v394
    %411 = vst [vmem:[%s4 + $0x50] sm:$0xff] %v395
    %412 = vst [vmem:[%s4 + $0x58] sm:$0xff] %v396
    %413 = vst [vmem:[%s4 + $0x60] sm:$0xff] %v397
    %414 = vst [vmem:[%s4 + $0x68] sm:$0xff] %v398
    %415 = vst [vmem:[%s4 + $0x70] sm:$0xff] %v399
    %416 = vst [vmem:[%s4 + $0x78] sm:$0xff] %v400
  $region25: #{basic_block_forward.5} parent=0 // pred_fallthru
    _
  // Predicated region
  $region26: #{basic_block_forward.5} parent=0 // pred_check
    _
  $region27: #{basic_block_forward.5} parent=0 // pred_check_branch
    %418 = sbr.rel (0) target = $region29
  $region28: #{basic_block_forward.5} parent=0 // pred_region
    _
  $region29: #{basic_block_forward.5} parent=0 // pred_fallthru
    _
  // Predicated region
  $region30: #{basic_block_forward.5} parent=0 // pred_check
    _
  $region31: #{basic_block_forward.5} parent=0 // pred_check_branch
    %420 = sbr.rel (0) target = $region33
  $region32: #{basic_block_forward.5} parent=0 // pred_region
    _
  $region33: #{basic_block_forward.5} parent=0 // pred_fallthru
    _

</llo_original>
